<compile_context>
chip_gen: v7x
topology: tpu7x:2x2x1
jax: 0.10.0
libtpu: 0.0.40
codegen_flags: <defaults>
</compile_context>

<pallas_src>
import functools

import jax
import jax.numpy as jnp
from jax.experimental import pallas as pl
from jax.experimental.pallas import tpu as pltpu


def _round_up(n, m):
    return ((n + m - 1) // m) * m


def _net_kernel(x_ref,
                w1_ref, b1_ref,
                w2_ref, b2_ref,
                w3_ref, b3_ref,
                w4_ref, b4_ref,
                w5_ref, b5_ref,
                w6_ref, b6_ref,
                w7_ref, b7_ref,
                o_ref):
    """Forward pass of Net for one batch tile (weights are VMEM-resident)."""

    def lin_relu(h_f32, w_ref, b_row):
        # bf16 operands for the MXU, f32 accumulation, f32 bias + ReLU epilogue.
        acc = jnp.dot(h_f32.astype(jnp.bfloat16), w_ref[...],
                      preferred_element_type=jnp.float32)
        return jnp.maximum(acc + b_row, 0.0)

    x = x_ref[...]                           # (tb, 8) f32
    b2 = b2_ref[...]                         # hoisted: fc2 bias is used twice

    x1 = lin_relu(x, w1_ref, b1_ref[...])    # (tb, 256)  fc1
    h = lin_relu(x1, w2_ref, b2)             # (tb, 128)  fc2
    h = lin_relu(h, w3_ref, b3_ref[...])     # (tb, 256)  fc3
    h = lin_relu(h + x1, w2_ref, b2)         # (tb, 128)  fc2 (shared weights) on residual
    h = lin_relu(h, w4_ref, b4_ref[...])     # (tb, 64)   fc4
    h = lin_relu(h, w5_ref, b5_ref[...])     # (tb, 32)   fc5
    h = lin_relu(h, w6_ref, b6_ref[...])     # (tb, 4)    fc6

    # fc7: (tb, 4) @ (4, 1) + b  -> VPU broadcast-mul + 4-lane reduce (no MXU pass).
    out = jnp.sum(h * w7_ref[...], axis=-1, keepdims=True) + b7_ref[...]
    o_ref[...] = out                         # (tb, 1) f32
    # TODO(synk): output stays (tb, 1) (masked vst); a lane-dense (1, tb) layout
    # would need an in-kernel sublane->lane transpose, skipped for robustness.


def _prep_params(params):
    """Pack params for the kernel.

    params: list of (W_t, b) with W_t = (in_features, out_features), f32.
    Returns flat list: w1..w6 as bf16 (in, out), biases as f32 (1, out),
    fc7 weight as f32 (1, 4) for the VPU epilogue, fc7 bias as f32 (1, 1).
    """
    flat = []
    for li, (w, b) in enumerate(params):
        if li < 6:
            flat.append(w.astype(jnp.bfloat16))
            flat.append(b.reshape(1, -1).astype(jnp.float32))
        else:  # fc7
            flat.append(w.reshape(1, -1).astype(jnp.float32))  # (4,1) -> (1,4)
            flat.append(b.reshape(1, 1).astype(jnp.float32))
    return flat


@functools.partial(jax.jit, static_argnames=("tile_b",))
def net_forward(x, params, tile_b=1024):
    """x: (B, 8).  params: list of (W_t (in,out), b (out,)) in f32."""
    B, F = x.shape
    assert F == 8
    # Batch tile: multiple of 256 (MXU-friendly), capped by tile_b, >= padded B if small.
    tb = min(tile_b, _round_up(B, 256))
    B_pad = _round_up(B, tb)

    x32 = x.astype(jnp.float32)
    if B_pad != B:
        x32 = jnp.pad(x32, ((0, B_pad - B), (0, 0)))

    flat = _prep_params(params)
    grid = (B_pad // tb,)

    x_spec = pl.BlockSpec((tb, 8), lambda i: (i, 0))
    # Constant block index => weights/biases stay VMEM-resident across the grid.
    w_specs = [pl.BlockSpec(a.shape, lambda i: (0, 0)) for a in flat]
    out_spec = pl.BlockSpec((tb, 1), lambda i: (i, 0))

    out = pl.pallas_call(
        _net_kernel,
        out_shape=jax.ShapeDtypeStruct((B_pad, 1), jnp.float32),
        grid=grid,
        in_specs=[x_spec] + w_specs,
        out_specs=out_spec,
        compiler_params=pltpu.CompilerParams(
            dimension_semantics=("parallel",)),  # shard batch tiles across TCs (v7x)
    )(x32, *flat)
    return out[:B]


def init_params(key):
    """Deterministic init mimicking nn.Linear default (uniform +-1/sqrt(fan_in)).
    Weights are stored transposed: (in_features, out_features), f32."""
    dims = [(8, 256), (256, 128), (128, 256), (128, 64), (64, 32), (32, 4), (4, 1)]
    params = []
    for (fan_in, fan_out) in dims:
        key, kw, kb = jax.random.split(key, 3)
        bound = 1.0 / jnp.sqrt(float(fan_in))
        w = jax.random.uniform(kw, (fan_in, fan_out), jnp.float32, -bound, bound)
        b = jax.random.uniform(kb, (fan_out,), jnp.float32, -bound, bound)
        params.append((w, b))
    return params


def net_reference(x, params):
    """Pure-JAX f32 reference of the same forward pass."""
    def lin(h, p):
        return h @ p[0] + p[1]

    relu = lambda h: jnp.maximum(h, 0.0)
    x1 = relu(lin(x, params[0]))
    h = relu(lin(x1, params[1]))
    h = relu(lin(h, params[2]))
    h = relu(lin(h + x1, params[1]))   # fc2 reused on the residual, as in the module
    h = relu(lin(h, params[3]))
    h = relu(lin(h, params[4]))
    h = relu(lin(h, params[5]))
    return lin(h, params[6])


if __name__ == "__main__":
    key = jax.random.PRNGKey(0)
    kx, kp, kx2 = jax.random.split(key, 3)
    params = init_params(kp)

    # Primary small-shape check (B=8): single grid step.
    B = 8
    x = jax.random.normal(kx, (B, 8), jnp.float32)
    out = jax.block_until_ready(net_forward(x, params))
    ref = net_reference(x, params)
    assert out.shape == (B, 1)
    scale = jnp.maximum(jnp.max(jnp.abs(ref)), 1.0)
    assert jnp.max(jnp.abs(out - ref)) / scale < 5e-2, "mismatch (small batch)"

    # Multi-tile check: non-multiple batch exercises grid > 1 + padding + slicing.
    B2 = 520
    x2 = jax.random.normal(kx2, (B2, 8), jnp.float32)
    out2 = jax.block_until_ready(net_forward(x2, params, tile_b=256))
    ref2 = net_reference(x2, params)
    assert out2.shape == (B2, 1)
    scale2 = jnp.maximum(jnp.max(jnp.abs(ref2)), 1.0)
    assert jnp.max(jnp.abs(out2 - ref2)) / scale2 < 5e-2, "mismatch (multi-tile)"

    print("KERNEL_OK")
</pallas_src>

<mosaic_0001>
module attributes {stable_mosaic.version = 11 : i64} {
  func.func @_net_kernel(%arg0: i32, %arg1: memref<256x8xf32, #tpu.memory_space<vmem>>, %arg2: memref<8x256xbf16, #tpu.memory_space<vmem>>, %arg3: memref<1x256xf32, #tpu.memory_space<vmem>>, %arg4: memref<256x128xbf16, #tpu.memory_space<vmem>>, %arg5: memref<1x128xf32, #tpu.memory_space<vmem>>, %arg6: memref<128x256xbf16, #tpu.memory_space<vmem>>, %arg7: memref<1x256xf32, #tpu.memory_space<vmem>>, %arg8: memref<128x64xbf16, #tpu.memory_space<vmem>>, %arg9: memref<1x64xf32, #tpu.memory_space<vmem>>, %arg10: memref<64x32xbf16, #tpu.memory_space<vmem>>, %arg11: memref<1x32xf32, #tpu.memory_space<vmem>>, %arg12: memref<32x4xbf16, #tpu.memory_space<vmem>>, %arg13: memref<1x4xf32, #tpu.memory_space<vmem>>, %arg14: memref<1x4xf32, #tpu.memory_space<vmem>>, %arg15: memref<1x1xf32, #tpu.memory_space<vmem>>, %arg16: memref<256x1xf32, #tpu.memory_space<vmem>>) attributes {dimension_semantics = [#tpu.dimension_semantics<parallel>], iteration_bounds = array<i64: 1>, scalar_prefetch = 0 : i64, scratch_operands = 0 : i64, tpu.core_type = #tpu.core_type<tc>, window_params = [{transform_indices = @transform_0, window_bounds = array<i64: 256, 8>}, {pipeline_mode = #tpu.pipeline_mode<synchronous>, transform_indices = @transform_1, window_bounds = array<i64: 8, 256>}, {pipeline_mode = #tpu.pipeline_mode<synchronous>, transform_indices = @transform_2, window_bounds = array<i64: 1, 256>}, {pipeline_mode = #tpu.pipeline_mode<synchronous>, transform_indices = @transform_3, window_bounds = array<i64: 256, 128>}, {pipeline_mode = #tpu.pipeline_mode<synchronous>, transform_indices = @transform_4, window_bounds = array<i64: 1, 128>}, {pipeline_mode = #tpu.pipeline_mode<synchronous>, transform_indices = @transform_5, window_bounds = array<i64: 128, 256>}, {pipeline_mode = #tpu.pipeline_mode<synchronous>, transform_indices = @transform_6, window_bounds = array<i64: 1, 256>}, {pipeline_mode = #tpu.pipeline_mode<synchronous>, transform_indices = @transform_7, window_bounds = array<i64: 128, 64>}, {pipeline_mode = #tpu.pipeline_mode<synchronous>, transform_indices = @transform_8, window_bounds = array<i64: 1, 64>}, {pipeline_mode = #tpu.pipeline_mode<synchronous>, transform_indices = @transform_9, window_bounds = array<i64: 64, 32>}, {pipeline_mode = #tpu.pipeline_mode<synchronous>, transform_indices = @transform_10, window_bounds = array<i64: 1, 32>}, {pipeline_mode = #tpu.pipeline_mode<synchronous>, transform_indices = @transform_11, window_bounds = array<i64: 32, 4>}, {pipeline_mode = #tpu.pipeline_mode<synchronous>, transform_indices = @transform_12, window_bounds = array<i64: 1, 4>}, {pipeline_mode = #tpu.pipeline_mode<synchronous>, transform_indices = @transform_13, window_bounds = array<i64: 1, 4>}, {pipeline_mode = #tpu.pipeline_mode<synchronous>, transform_indices = @transform_14, window_bounds = array<i64: 1, 1>}, {transform_indices = @transform_15, window_bounds = array<i64: 256, 1>}]} {
    %c0 = arith.constant 0 : index
    %c0_0 = arith.constant 0 : index
    %0 = vector.load %arg1[%c0, %c0_0] : memref<256x8xf32, #tpu.memory_space<vmem>>, vector<256x8xf32>
    %c0_1 = arith.constant 0 : index
    %c0_2 = arith.constant 0 : index
    %1 = vector.load %arg5[%c0_1, %c0_2] : memref<1x128xf32, #tpu.memory_space<vmem>>, vector<1x128xf32>
    %c0_3 = arith.constant 0 : index
    %c0_4 = arith.constant 0 : index
    %2 = vector.load %arg3[%c0_3, %c0_4] : memref<1x256xf32, #tpu.memory_space<vmem>>, vector<1x256xf32>
    %3 = arith.truncf %0 : vector<256x8xf32> to vector<256x8xbf16>
    %c0_5 = arith.constant 0 : index
    %c0_6 = arith.constant 0 : index
    %4 = vector.load %arg2[%c0_5, %c0_6] : memref<8x256xbf16, #tpu.memory_space<vmem>>, vector<8x256xbf16>
    %cst = arith.constant dense<0.000000e+00> : vector<256x256xf32>
    %5 = tpu.matmul %3, %4, %cst {dimension_numbers = #tpu.dot_dimension_numbers<[1], [0], [0], [1], [0, 0, 1, 1], [], []>} : vector<256x8xbf16>, vector<8x256xbf16>, vector<256x256xf32> -> vector<256x256xf32>
    %6 = vector.broadcast %2 : vector<1x256xf32> to vector<256x256xf32>
    %7 = arith.addf %5, %6 : vector<256x256xf32>
    %cst_7 = arith.constant 0.000000e+00 : f32
    %8 = vector.broadcast %cst_7 : f32 to vector<256x256xf32>
    %9 = arith.maximumf %7, %8 : vector<256x256xf32>
    %10 = arith.truncf %9 : vector<256x256xf32> to vector<256x256xbf16>
    %c0_8 = arith.constant 0 : index
    %c0_9 = arith.constant 0 : index
    %11 = vector.load %arg4[%c0_8, %c0_9] : memref<256x128xbf16, #tpu.memory_space<vmem>>, vector<256x128xbf16>
    %cst_10 = arith.constant dense<0.000000e+00> : vector<256x128xf32>
    %12 = tpu.matmul %10, %11, %cst_10 {dimension_numbers = #tpu.dot_dimension_numbers<[1], [0], [0], [1], [0, 0, 1, 1], [], []>} : vector<256x256xbf16>, vector<256x128xbf16>, vector<256x128xf32> -> vector<256x128xf32>
    %13 = vector.broadcast %1 : vector<1x128xf32> to vector<256x128xf32>
    %14 = arith.addf %12, %13 : vector<256x128xf32>
    %cst_11 = arith.constant 0.000000e+00 : f32
    %15 = vector.broadcast %cst_11 : f32 to vector<256x128xf32>
    %16 = arith.maximumf %14, %15 : vector<256x128xf32>
    %c0_12 = arith.constant 0 : index
    %c0_13 = arith.constant 0 : index
    %17 = vector.load %arg7[%c0_12, %c0_13] : memref<1x256xf32, #tpu.memory_space<vmem>>, vector<1x256xf32>
    %18 = arith.truncf %16 : vector<256x128xf32> to vector<256x128xbf16>
    %c0_14 = arith.constant 0 : index
    %c0_15 = arith.constant 0 : index
    %19 = vector.load %arg6[%c0_14, %c0_15] : memref<128x256xbf16, #tpu.memory_space<vmem>>, vector<128x256xbf16>
    %cst_16 = arith.constant dense<0.000000e+00> : vector<256x256xf32>
    %20 = tpu.matmul %18, %19, %cst_16 {dimension_numbers = #tpu.dot_dimension_numbers<[1], [0], [0], [1], [0, 0, 1, 1], [], []>} : vector<256x128xbf16>, vector<128x256xbf16>, vector<256x256xf32> -> vector<256x256xf32>
    %21 = vector.broadcast %17 : vector<1x256xf32> to vector<256x256xf32>
    %22 = arith.addf %20, %21 : vector<256x256xf32>
    %cst_17 = arith.constant 0.000000e+00 : f32
    %23 = vector.broadcast %cst_17 : f32 to vector<256x256xf32>
    %24 = arith.maximumf %22, %23 : vector<256x256xf32>
    %25 = arith.addf %24, %9 : vector<256x256xf32>
    %26 = arith.truncf %25 : vector<256x256xf32> to vector<256x256xbf16>
    %c0_18 = arith.constant 0 : index
    %c0_19 = arith.constant 0 : index
    %27 = vector.load %arg4[%c0_18, %c0_19] : memref<256x128xbf16, #tpu.memory_space<vmem>>, vector<256x128xbf16>
    %cst_20 = arith.constant dense<0.000000e+00> : vector<256x128xf32>
    %28 = tpu.matmul %26, %27, %cst_20 {dimension_numbers = #tpu.dot_dimension_numbers<[1], [0], [0], [1], [0, 0, 1, 1], [], []>} : vector<256x256xbf16>, vector<256x128xbf16>, vector<256x128xf32> -> vector<256x128xf32>
    %29 = vector.broadcast %1 : vector<1x128xf32> to vector<256x128xf32>
    %30 = arith.addf %28, %29 : vector<256x128xf32>
    %cst_21 = arith.constant 0.000000e+00 : f32
    %31 = vector.broadcast %cst_21 : f32 to vector<256x128xf32>
    %32 = arith.maximumf %30, %31 : vector<256x128xf32>
    %c0_22 = arith.constant 0 : index
    %c0_23 = arith.constant 0 : index
    %33 = vector.load %arg9[%c0_22, %c0_23] : memref<1x64xf32, #tpu.memory_space<vmem>>, vector<1x64xf32>
    %34 = arith.truncf %32 : vector<256x128xf32> to vector<256x128xbf16>
    %c0_24 = arith.constant 0 : index
    %c0_25 = arith.constant 0 : index
    %35 = vector.load %arg8[%c0_24, %c0_25] : memref<128x64xbf16, #tpu.memory_space<vmem>>, vector<128x64xbf16>
    %cst_26 = arith.constant dense<0.000000e+00> : vector<256x64xf32>
    %36 = tpu.matmul %34, %35, %cst_26 {dimension_numbers = #tpu.dot_dimension_numbers<[1], [0], [0], [1], [0, 0, 1, 1], [], []>} : vector<256x128xbf16>, vector<128x64xbf16>, vector<256x64xf32> -> vector<256x64xf32>
    %37 = vector.broadcast %33 : vector<1x64xf32> to vector<256x64xf32>
    %38 = arith.addf %36, %37 : vector<256x64xf32>
    %cst_27 = arith.constant 0.000000e+00 : f32
    %39 = vector.broadcast %cst_27 : f32 to vector<256x64xf32>
    %40 = arith.maximumf %38, %39 : vector<256x64xf32>
    %c0_28 = arith.constant 0 : index
    %c0_29 = arith.constant 0 : index
    %41 = vector.load %arg11[%c0_28, %c0_29] : memref<1x32xf32, #tpu.memory_space<vmem>>, vector<1x32xf32>
    %42 = arith.truncf %40 : vector<256x64xf32> to vector<256x64xbf16>
    %c0_30 = arith.constant 0 : index
    %c0_31 = arith.constant 0 : index
    %43 = vector.load %arg10[%c0_30, %c0_31] : memref<64x32xbf16, #tpu.memory_space<vmem>>, vector<64x32xbf16>
    %cst_32 = arith.constant dense<0.000000e+00> : vector<256x32xf32>
    %44 = tpu.matmul %42, %43, %cst_32 {dimension_numbers = #tpu.dot_dimension_numbers<[1], [0], [0], [1], [0, 0, 1, 1], [], []>} : vector<256x64xbf16>, vector<64x32xbf16>, vector<256x32xf32> -> vector<256x32xf32>
    %45 = vector.broadcast %41 : vector<1x32xf32> to vector<256x32xf32>
    %46 = arith.addf %44, %45 : vector<256x32xf32>
    %cst_33 = arith.constant 0.000000e+00 : f32
    %47 = vector.broadcast %cst_33 : f32 to vector<256x32xf32>
    %48 = arith.maximumf %46, %47 : vector<256x32xf32>
    %c0_34 = arith.constant 0 : index
    %c0_35 = arith.constant 0 : index
    %49 = vector.load %arg13[%c0_34, %c0_35] : memref<1x4xf32, #tpu.memory_space<vmem>>, vector<1x4xf32>
    %50 = arith.truncf %48 : vector<256x32xf32> to vector<256x32xbf16>
    %c0_36 = arith.constant 0 : index
    %c0_37 = arith.constant 0 : index
    %51 = vector.load %arg12[%c0_36, %c0_37] : memref<32x4xbf16, #tpu.memory_space<vmem>>, vector<32x4xbf16>
    %cst_38 = arith.constant dense<0.000000e+00> : vector<256x4xf32>
    %52 = tpu.matmul %50, %51, %cst_38 {dimension_numbers = #tpu.dot_dimension_numbers<[1], [0], [0], [1], [0, 0, 1, 1], [], []>} : vector<256x32xbf16>, vector<32x4xbf16>, vector<256x4xf32> -> vector<256x4xf32>
    %53 = vector.broadcast %49 : vector<1x4xf32> to vector<256x4xf32>
    %54 = arith.addf %52, %53 : vector<256x4xf32>
    %cst_39 = arith.constant 0.000000e+00 : f32
    %55 = vector.broadcast %cst_39 : f32 to vector<256x4xf32>
    %56 = arith.maximumf %54, %55 : vector<256x4xf32>
    %c0_40 = arith.constant 0 : index
    %c0_41 = arith.constant 0 : index
    %57 = vector.load %arg14[%c0_40, %c0_41] : memref<1x4xf32, #tpu.memory_space<vmem>>, vector<1x4xf32>
    %58 = vector.broadcast %57 : vector<1x4xf32> to vector<256x4xf32>
    %59 = arith.mulf %56, %58 : vector<256x4xf32>
    %cst_42 = arith.constant dense<0.000000e+00> : vector<256xf32>
    %60 = vector.multi_reduction <add>, %59, %cst_42 [1] : vector<256x4xf32> to vector<256xf32>
    %61 = vector.shape_cast %60 : vector<256xf32> to vector<256x1xf32>
    %c0_43 = arith.constant 0 : index
    %c0_44 = arith.constant 0 : index
    %62 = vector.load %arg15[%c0_43, %c0_44] : memref<1x1xf32, #tpu.memory_space<vmem>>, vector<1x1xf32>
    %63 = vector.broadcast %62 : vector<1x1xf32> to vector<256x1xf32>
    %64 = arith.addf %61, %63 : vector<256x1xf32>
    %c0_45 = arith.constant 0 : index
    %c0_46 = arith.constant 0 : index
    %65 = vector.load %arg16[%c0_45, %c0_46] : memref<256x1xf32, #tpu.memory_space<vmem>>, vector<256x1xf32>
    tpu.vector_store %arg16[%c0_45, %c0_46], %64 {strides = array<i32>} : memref<256x1xf32, #tpu.memory_space<vmem>>, vector<256x1xf32>,
    return
  }
  func.func @transform_0(%arg0: i32) -> (i32, i32) {
    %c0_i32 = arith.constant 0 : i32
    %c0_i32_0 = arith.constant 0 : i32
    return %arg0, %c0_i32 : i32, i32
  }
  func.func @transform_1(%arg0: i32) -> (i32, i32) {
    %c0_i32 = arith.constant 0 : i32
    %c0_i32_0 = arith.constant 0 : i32
    %c0_i32_1 = arith.constant 0 : i32
    return %c0_i32, %c0_i32_0 : i32, i32
  }
  func.func @transform_2(%arg0: i32) -> (i32, i32) {
    %c0_i32 = arith.constant 0 : i32
    %c0_i32_0 = arith.constant 0 : i32
    %c0_i32_1 = arith.constant 0 : i32
    return %c0_i32, %c0_i32_0 : i32, i32
  }
  func.func @transform_3(%arg0: i32) -> (i32, i32) {
    %c0_i32 = arith.constant 0 : i32
    %c0_i32_0 = arith.constant 0 : i32
    %c0_i32_1 = arith.constant 0 : i32
    return %c0_i32, %c0_i32_0 : i32, i32
  }
  func.func @transform_4(%arg0: i32) -> (i32, i32) {
    %c0_i32 = arith.constant 0 : i32
    %c0_i32_0 = arith.constant 0 : i32
    %c0_i32_1 = arith.constant 0 : i32
    return %c0_i32, %c0_i32_0 : i32, i32
  }
  func.func @transform_5(%arg0: i32) -> (i32, i32) {
    %c0_i32 = arith.constant 0 : i32
    %c0_i32_0 = arith.constant 0 : i32
    %c0_i32_1 = arith.constant 0 : i32
    return %c0_i32, %c0_i32_0 : i32, i32
  }
  func.func @transform_6(%arg0: i32) -> (i32, i32) {
    %c0_i32 = arith.constant 0 : i32
    %c0_i32_0 = arith.constant 0 : i32
    %c0_i32_1 = arith.constant 0 : i32
    return %c0_i32, %c0_i32_0 : i32, i32
  }
  func.func @transform_7(%arg0: i32) -> (i32, i32) {
    %c0_i32 = arith.constant 0 : i32
    %c0_i32_0 = arith.constant 0 : i32
    %c0_i32_1 = arith.constant 0 : i32
    return %c0_i32, %c0_i32_0 : i32, i32
  }
  func.func @transform_8(%arg0: i32) -> (i32, i32) {
    %c0_i32 = arith.constant 0 : i32
    %c0_i32_0 = arith.constant 0 : i32
    %c0_i32_1 = arith.constant 0 : i32
    return %c0_i32, %c0_i32_0 : i32, i32
  }
  func.func @transform_9(%arg0: i32) -> (i32, i32) {
    %c0_i32 = arith.constant 0 : i32
    %c0_i32_0 = arith.constant 0 : i32
    %c0_i32_1 = arith.constant 0 : i32
    return %c0_i32, %c0_i32_0 : i32, i32
  }
  func.func @transform_10(%arg0: i32) -> (i32, i32) {
    %c0_i32 = arith.constant 0 : i32
    %c0_i32_0 = arith.constant 0 : i32
    %c0_i32_1 = arith.constant 0 : i32
    return %c0_i32, %c0_i32_0 : i32, i32
  }
  func.func @transform_11(%arg0: i32) -> (i32, i32) {
    %c0_i32 = arith.constant 0 : i32
    %c0_i32_0 = arith.constant 0 : i32
    %c0_i32_1 = arith.constant 0 : i32
    return %c0_i32, %c0_i32_0 : i32, i32
  }
  func.func @transform_12(%arg0: i32) -> (i32, i32) {
    %c0_i32 = arith.constant 0 : i32
    %c0_i32_0 = arith.constant 0 : i32
    %c0_i32_1 = arith.constant 0 : i32
    return %c0_i32, %c0_i32_0 : i32, i32
  }
  func.func @transform_13(%arg0: i32) -> (i32, i32) {
    %c0_i32 = arith.constant 0 : i32
    %c0_i32_0 = arith.constant 0 : i32
    %c0_i32_1 = arith.constant 0 : i32
    return %c0_i32, %c0_i32_0 : i32, i32
  }
  func.func @transform_14(%arg0: i32) -> (i32, i32) {
    %c0_i32 = arith.constant 0 : i32
    %c0_i32_0 = arith.constant 0 : i32
    %c0_i32_1 = arith.constant 0 : i32
    return %c0_i32, %c0_i32_0 : i32, i32
  }
  func.func @transform_15(%arg0: i32) -> (i32, i32) {
    %c0_i32 = arith.constant 0 : i32
    %c0_i32_0 = arith.constant 0 : i32
    return %arg0, %c0_i32 : i32, i32
  }
}

</mosaic_0001>

<llo_original>
// kernel: net_forward.1
$region0: #{net_forward.1}
  #allocation0 [shape = 'u32[]', space=smem, size = 0x4, offset = 0x4, fixed_abs, tag = 'smem constant byte address 0x4 - core index']
  #allocation1 [shape = 'u32[144,128]{1,0:T(1,128)}', space=vmem, size = 0x12000, scoped, tag = 'internal scratch']
  #allocation2 [shape = 'f32[1,1]{1,0:T(1,128)S(1)}', space=vmem, size = 0x200, scoped, tag = 'scoped memory for net_forward.1']
  %s0 = inlined_call_operand.vmem [shape: f32[256,8], index: 0, kind: input, shape index: {}]
  %s1 = inlined_call_operand.vmem [shape: bf16[8,256], index: 1, kind: input, shape index: {}]
  %s2 = inlined_call_operand.vmem [shape: f32[1,256], index: 2, kind: input, shape index: {}]
  %s3 = inlined_call_operand.vmem [shape: bf16[256,128], index: 3, kind: input, shape index: {}]
  %s4 = inlined_call_operand.vmem [shape: f32[1,128], index: 4, kind: input, shape index: {}]
  %s5 = inlined_call_operand.vmem [shape: bf16[128,256], index: 5, kind: input, shape index: {}]
  %s6 = inlined_call_operand.vmem [shape: f32[1,256], index: 6, kind: input, shape index: {}]
  %s7 = inlined_call_operand.vmem [shape: bf16[128,64], index: 7, kind: input, shape index: {}]
  %s8 = inlined_call_operand.vmem [shape: f32[1,64], index: 8, kind: input, shape index: {}]
  %s9 = inlined_call_operand.vmem [shape: bf16[64,32], index: 9, kind: input, shape index: {}]
  %s10 = inlined_call_operand.vmem [shape: f32[1,32], index: 10, kind: input, shape index: {}]
  %s11 = inlined_call_operand.vmem [shape: bf16[32,4], index: 11, kind: input, shape index: {}]
  %s12 = inlined_call_operand.vmem [shape: f32[1,4], index: 12, kind: input, shape index: {}]
  %s13 = inlined_call_operand.vmem [shape: f32[1,4], index: 13, kind: input, shape index: {}]
  %s14 = inlined_call_operand.<no memory space> [shape: f32[1,1], index: 14, kind: input, shape index: {}]
  %s15 = inlined_call_operand.vmem [shape: f32[256,1], index: 15, kind: output, shape index: {}]
  %s16 = sld [smem:[#allocation0]]
  $region70: #{net_forward.1} parent=0
    _
  %s18 = ssub.s32 1, %s16
  %s19 = scalar_select 0, %s18, %s16
  %v20 = vstv %s14
  %21 = vst [vmem:[#allocation2] sm:$0x1] %v20
  // Predicated region
  $region2: #{net_forward.1} parent=0 // pred_check
    _
  $region3: #{net_forward.1} parent=0 // pred_check_branch
    %23 = sbr.rel (0) target = $region5
  $region4: #{net_forward.1} parent=0 // pred_region
    _
  $region5: #{net_forward.1} parent=0 // pred_fallthru
    _
  // Predicated region
  $region6: #{net_forward.1} parent=0 // pred_check
    _
  $region7: #{net_forward.1} parent=0 // pred_check_branch
    %25 = sbr.rel (0) target = $region9
  $region8: #{net_forward.1} parent=0 // pred_region
    _
  $region9: #{net_forward.1} parent=0 // pred_fallthru
    _
  // Predicated region
  $region10: #{net_forward.1} parent=0 // pred_check
    _
  $region11: #{net_forward.1} parent=0 // pred_check_branch
    %27 = sbr.rel (0) target = $region13
  $region12: #{net_forward.1} parent=0 // pred_region
    _
  $region13: #{net_forward.1} parent=0 // pred_fallthru
    _
  // Predicated region
  $region14: #{net_forward.1} parent=0 // pred_check
    _
  $region15: #{net_forward.1} parent=0 // pred_check_branch
    %29 = sbr.rel (0) target = $region17
  $region16: #{net_forward.1} parent=0 // pred_region
    _
  $region17: #{net_forward.1} parent=0 // pred_fallthru
    _
  // Predicated region
  $region18: #{net_forward.1} parent=0 // pred_check
    _
  $region19: #{net_forward.1} parent=0 // pred_check_branch
    %31 = sbr.rel (0) target = $region21
  $region20: #{net_forward.1} parent=0 // pred_region
    _
  $region21: #{net_forward.1} parent=0 // pred_fallthru
    _
  // Predicated region
  $region22: #{net_forward.1} parent=0 // pred_check
    _
  $region23: #{net_forward.1} parent=0 // pred_check_branch
    %33 = sbr.rel (0) target = $region25
  $region24: #{net_forward.1} parent=0 // pred_region
    _
  $region25: #{net_forward.1} parent=0 // pred_fallthru
    _
  // Predicated region
  $region26: #{net_forward.1} parent=0 // pred_check
    _
  $region27: #{net_forward.1} parent=0 // pred_check_branch
    %35 = sbr.rel (0) target = $region29
  $region28: #{net_forward.1} parent=0 // pred_region
    _
  $region29: #{net_forward.1} parent=0 // pred_fallthru
    _
  // Predicated region
  $region30: #{net_forward.1} parent=0 // pred_check
    _
  $region31: #{net_forward.1} parent=0 // pred_check_branch
    %37 = sbr.rel (0) target = $region33
  $region32: #{net_forward.1} parent=0 // pred_region
    _
  $region33: #{net_forward.1} parent=0 // pred_fallthru
    _
  // Predicated region
  $region34: #{net_forward.1} parent=0 // pred_check
    _
  $region35: #{net_forward.1} parent=0 // pred_check_branch
    %39 = sbr.rel (0) target = $region37
  $region36: #{net_forward.1} parent=0 // pred_region
    _
  $region37: #{net_forward.1} parent=0 // pred_fallthru
    _
  // Predicated region
  $region38: #{net_forward.1} parent=0 // pred_check
    _
  $region39: #{net_forward.1} parent=0 // pred_check_branch
    %41 = sbr.rel (0) target = $region41
  $region40: #{net_forward.1} parent=0 // pred_region
    _
  $region41: #{net_forward.1} parent=0 // pred_fallthru
    _
  // Predicated region
  $region42: #{net_forward.1} parent=0 // pred_check
    _
  $region43: #{net_forward.1} parent=0 // pred_check_branch
    %43 = sbr.rel (0) target = $region45
  $region44: #{net_forward.1} parent=0 // pred_region
    _
  $region45: #{net_forward.1} parent=0 // pred_fallthru
    _
  // Predicated region
  $region46: #{net_forward.1} parent=0 // pred_check
    _
  $region47: #{net_forward.1} parent=0 // pred_check_branch
    %45 = sbr.rel (0) target = $region49
  $region48: #{net_forward.1} parent=0 // pred_region
    _
  $region49: #{net_forward.1} parent=0 // pred_fallthru
    _
  // Predicated region
  $region50: #{net_forward.1} parent=0 // pred_check
    _
  $region51: #{net_forward.1} parent=0 // pred_check_branch
    %47 = sbr.rel (0) target = $region53
  $region52: #{net_forward.1} parent=0 // pred_region
    _
  $region53: #{net_forward.1} parent=0 // pred_fallthru
    _
  // Predicated region
  $region54: #{net_forward.1} parent=0 // pred_check
    _
  $region55: #{net_forward.1} parent=0 // pred_check_branch
    %49 = sbr.rel (0) target = $region57
  $region56: #{net_forward.1} parent=0 // pred_region
    _
  $region57: #{net_forward.1} parent=0 // pred_fallthru
    _
  // Predicated region
  $region58: #{net_forward.1} parent=0 // pred_check
    _
  $region59: #{net_forward.1} parent=0 // pred_check_branch
    %51 = sbr.rel (0) target = $region61
  $region60: #{net_forward.1} parent=0 // pred_region
    _
  $region61: #{net_forward.1} parent=0 // pred_fallthru
    _
  %v53 = vld [vmem:[%s0] sm:$0xff]
  %v54 = vld [vmem:[%s0 + $0x8] sm:$0xff]
  %v55 = vld [vmem:[%s0 + $0x10] sm:$0xff]
  %v56 = vld [vmem:[%s0 + $0x18] sm:$0xff]
  %v57 = vld [vmem:[%s0 + $0x20] sm:$0xff]
  %v58 = vld [vmem:[%s0 + $0x28] sm:$0xff]
  %v59 = vld [vmem:[%s0 + $0x30] sm:$0xff]
  %v60 = vld [vmem:[%s0 + $0x38] sm:$0xff]
  %v61 = vld [vmem:[%s0 + $0x40] sm:$0xff]
  %v62 = vld [vmem:[%s0 + $0x48] sm:$0xff]
  %v63 = vld [vmem:[%s0 + $0x50] sm:$0xff]
  %v64 = vld [vmem:[%s0 + $0x58] sm:$0xff]
  %v65 = vld [vmem:[%s0 + $0x60] sm:$0xff]
  %v66 = vld [vmem:[%s0 + $0x68] sm:$0xff]
  %v67 = vld [vmem:[%s0 + $0x70] sm:$0xff]
  %v68 = vld [vmem:[%s0 + $0x78] sm:$0xff]
  %v69 = vld [vmem:[%s0 + $0x80] sm:$0xff]
  %v70 = vld [vmem:[%s0 + $0x88] sm:$0xff]
  %v71 = vld [vmem:[%s0 + $0x90] sm:$0xff]
  %v72 = vld [vmem:[%s0 + $0x98] sm:$0xff]
  %v73 = vld [vmem:[%s0 + $0xa0] sm:$0xff]
  %v74 = vld [vmem:[%s0 + $0xa8] sm:$0xff]
  %v75 = vld [vmem:[%s0 + $0xb0] sm:$0xff]
  %v76 = vld [vmem:[%s0 + $0xb8] sm:$0xff]
  %v77 = vld [vmem:[%s0 + $0xc0] sm:$0xff]
  %v78 = vld [vmem:[%s0 + $0xc8] sm:$0xff]
  %v79 = vld [vmem:[%s0 + $0xd0] sm:$0xff]
  %v80 = vld [vmem:[%s0 + $0xd8] sm:$0xff]
  %v81 = vld [vmem:[%s0 + $0xe0] sm:$0xff]
  %v82 = vld [vmem:[%s0 + $0xe8] sm:$0xff]
  %v83 = vld [vmem:[%s0 + $0xf0] sm:$0xff]
  %v84 = vld [vmem:[%s0 + $0xf8] sm:$0xff]
  %v85 = vld [vmem:[%s4] sm:$0x1]
  %v86 = vld [vmem:[%s2] sm:$0x3]
  %v87 = vpack.c.bf16 %v54, %v53
  %v88 = vpack.c.bf16 %v56, %v55
  %v89 = vpack.c.bf16 %v58, %v57
  %v90 = vpack.c.bf16 %v60, %v59
  %v91 = vpack.c.bf16 %v62, %v61
  %v92 = vpack.c.bf16 %v64, %v63
  %v93 = vpack.c.bf16 %v66, %v65
  %v94 = vpack.c.bf16 %v68, %v67
  %v95 = vpack.c.bf16 %v70, %v69
  %v96 = vpack.c.bf16 %v72, %v71
  %v97 = vpack.c.bf16 %v74, %v73
  %v98 = vpack.c.bf16 %v76, %v75
  %v99 = vpack.c.bf16 %v78, %v77
  %v100 = vpack.c.bf16 %v80, %v79
  %v101 = vpack.c.bf16 %v82, %v81
  %v102 = vpack.c.bf16 %v84, %v83
  %v103 = vld [vmem:[%s1] sm:$0xff]
  %v105 = vlaneseq
  %v106 = vshrl.u32 %v105, 7
  %v107 = vsub.s32 0, %v106
  %v108 = vrot.slane %v86, %v107
  %v109 = vlaneseq
  %v110 = vshrl.u32 %v109, 7
  %v111 = vsub.s32 1, %v110
  %v112 = vrot.slane %v86, %v111
  %v116 = vunpack.c.l.b16 %v103
  %v117 = vunpack.c.h.b16 %v103
  %v118 = vpack.c.b16 %v116, %v116
  %v119 = vpack.c.b16 %v117, %v117
  %vm120 = vcmask 64512
  %v122 = vsel %vm120, %v87, 0
  %v125 = vsel %vm120, %v88, 0
  %v128 = vsel %vm120, %v89, 0
  %v131 = vsel %vm120, %v90, 0
  %v134 = vsel %vm120, %v91, 0
  %v137 = vsel %vm120, %v92, 0
  %v140 = vsel %vm120, %v93, 0
  %v143 = vsel %vm120, %v94, 0
  %v146 = vsel %vm120, %v95, 0
  %v149 = vsel %vm120, %v96, 0
  %v152 = vsel %vm120, %v97, 0
  %v155 = vsel %vm120, %v98, 0
  %v158 = vsel %vm120, %v99, 0
  %v161 = vsel %vm120, %v100, 0
  %v164 = vsel %vm120, %v101, 0
  %v167 = vsel %vm120, %v102, 0
  %vm169 = vcmask 1043456
  %v171 = vsel %vm169, %v118, 0
  %v174 = vsel %vm169, %v119, 0
  %176 = vmatprep.subr.bf16.mxu0 %v174
  %177 = vmatpush1.bf16.msra.mxu0 %v171
  %178 = vmatprep.subr.bf16.mxu0 0
  %179 = vmatpush1.bf16.msra.mxu0 0
  %180 = vmatprep.subr.bf16.mxu0 0
  %181 = vmatpush1.bf16.msra.mxu0 0
  %182 = vmatprep.subr.bf16.mxu0 0
  %183 = vmatpush1.bf16.msra.mxu0 0
  %184 = vmatprep.subr.bf16.mxu0 0
  %185 = vmatpush1.bf16.msra.mxu0 0
  %186 = vmatprep.subr.bf16.mxu0 0
  %187 = vmatpush1.bf16.msra.mxu0 0
  %188 = vmatprep.subr.bf16.mxu0 0
  %189 = vmatpush1.bf16.msra.mxu0 0
  %190 = vmatprep.subr.bf16.mxu0 0
  %191 = vmatpush1.bf16.msra.mxu0 0
  %192 = vmatprep.subr.bf16.mxu0 0
  %193 = vmatpush1.bf16.msra.mxu0 0
  %194 = vmatprep.subr.bf16.mxu0 0
  %195 = vmatpush1.bf16.msra.mxu0 0
  %196 = vmatprep.subr.bf16.mxu0 0
  %197 = vmatpush1.bf16.msra.mxu0 0
  %198 = vmatprep.subr.bf16.mxu0 0
  %199 = vmatpush1.bf16.msra.mxu0 0
  %200 = vmatprep.subr.bf16.mxu0 0
  %201 = vmatpush1.bf16.msra.mxu0 0
  %202 = vmatprep.subr.bf16.mxu0 0
  %203 = vmatpush1.bf16.msra.mxu0 0
  %204 = vmatprep.subr.bf16.mxu0 0
  %205 = vmatpush1.bf16.msra.mxu0 0
  %206 = vmatprep.subr.bf16.mxu0 0
  %207 = vmatpush1.bf16.msra.mxu0 0
  %208 = vmatprep.mubr.bf16.mxu0 0
  %209 = vmatmul.mubr.bf16.gmra.mrb[0].mxu0 %v122
  %v210 = vpop.f32.mrb[0].mxu0
  %v211 = vadd.f32 %v108, %v210
  %v212 = vpop.f32.mrb[0].mxu0
  %v213 = vadd.f32 %v112, %v212
  %v214 = vpop.f32.mrb[0].mxu0
  %v215 = vadd.f32 %v108, %v214
  %v216 = vpop.f32.mrb[0].mxu0
  %v217 = vadd.f32 %v112, %v216
  %218 = vmatprep.mubr.bf16.mxu0 0
  %219 = vmatmul.mubr.bf16.gmra.mrb[0].mxu0 %v125
  %v220 = vpop.f32.mrb[0].mxu0
  %v221 = vadd.f32 %v108, %v220
  %v222 = vpop.f32.mrb[0].mxu0
  %v223 = vadd.f32 %v112, %v222
  %v224 = vpop.f32.mrb[0].mxu0
  %v225 = vadd.f32 %v108, %v224
  %v226 = vpop.f32.mrb[0].mxu0
  %v227 = vadd.f32 %v112, %v226
  %228 = vmatprep.mubr.bf16.mxu0 0
  %229 = vmatmul.mubr.bf16.gmra.mrb[0].mxu0 %v128
  %v230 = vpop.f32.mrb[0].mxu0
  %v231 = vadd.f32 %v108, %v230
  %v232 = vpop.f32.mrb[0].mxu0
  %v233 = vadd.f32 %v112, %v232
  %v234 = vpop.f32.mrb[0].mxu0
  %v235 = vadd.f32 %v108, %v234
  %v236 = vpop.f32.mrb[0].mxu0
  %v237 = vadd.f32 %v112, %v236
  %238 = vmatprep.mubr.bf16.mxu0 0
  %239 = vmatmul.mubr.bf16.gmra.mrb[0].mxu0 %v131
  %v240 = vpop.f32.mrb[0].mxu0
  %v241 = vadd.f32 %v108, %v240
  %v242 = vpop.f32.mrb[0].mxu0
  %v243 = vadd.f32 %v112, %v242
  %v244 = vpop.f32.mrb[0].mxu0
  %v245 = vadd.f32 %v108, %v244
  %v246 = vpop.f32.mrb[0].mxu0
  %v247 = vadd.f32 %v112, %v246
  %248 = vmatprep.mubr.bf16.mxu0 0
  %249 = vmatmul.mubr.bf16.gmra.mrb[0].mxu0 %v134
  %v250 = vpop.f32.mrb[0].mxu0
  %v251 = vadd.f32 %v108, %v250
  %v252 = vpop.f32.mrb[0].mxu0
  %v253 = vadd.f32 %v112, %v252
  %v254 = vpop.f32.mrb[0].mxu0
  %v255 = vadd.f32 %v108, %v254
  %v256 = vpop.f32.mrb[0].mxu0
  %v257 = vadd.f32 %v112, %v256
  %258 = vmatprep.mubr.bf16.mxu0 0
  %259 = vmatmul.mubr.bf16.gmra.mrb[0].mxu0 %v137
  %v260 = vpop.f32.mrb[0].mxu0
  %v261 = vadd.f32 %v108, %v260
  %v262 = vpop.f32.mrb[0].mxu0
  %v263 = vadd.f32 %v112, %v262
  %v264 = vpop.f32.mrb[0].mxu0
  %v265 = vadd.f32 %v108, %v264
  %v266 = vpop.f32.mrb[0].mxu0
  %v267 = vadd.f32 %v112, %v266
  %268 = vmatprep.mubr.bf16.mxu0 0
  %269 = vmatmul.mubr.bf16.gmra.mrb[0].mxu0 %v140
  %v270 = vpop.f32.mrb[0].mxu0
  %v271 = vadd.f32 %v108, %v270
  %v272 = vpop.f32.mrb[0].mxu0
  %v273 = vadd.f32 %v112, %v272
  %v274 = vpop.f32.mrb[0].mxu0
  %v275 = vadd.f32 %v108, %v274
  %v276 = vpop.f32.mrb[0].mxu0
  %v277 = vadd.f32 %v112, %v276
  %278 = vmatprep.mubr.bf16.mxu0 0
  %279 = vmatmul.mubr.bf16.gmra.mrb[0].mxu0 %v143
  %v280 = vpop.f32.mrb[0].mxu0
  %v281 = vadd.f32 %v108, %v280
  %v282 = vpop.f32.mrb[0].mxu0
  %v283 = vadd.f32 %v112, %v282
  %v284 = vpop.f32.mrb[0].mxu0
  %v285 = vadd.f32 %v108, %v284
  %v286 = vpop.f32.mrb[0].mxu0
  %v287 = vadd.f32 %v112, %v286
  %288 = vmatprep.mubr.bf16.mxu0 0
  %289 = vmatmul.mubr.bf16.gmra.mrb[0].mxu0 %v146
  %v290 = vpop.f32.mrb[0].mxu0
  %v291 = vadd.f32 %v108, %v290
  %v292 = vpop.f32.mrb[0].mxu0
  %v293 = vadd.f32 %v112, %v292
  %v294 = vpop.f32.mrb[0].mxu0
  %v295 = vadd.f32 %v108, %v294
  %v296 = vpop.f32.mrb[0].mxu0
  %v297 = vadd.f32 %v112, %v296
  %298 = vmatprep.mubr.bf16.mxu0 0
  %299 = vmatmul.mubr.bf16.gmra.mrb[0].mxu0 %v149
  %v300 = vpop.f32.mrb[0].mxu0
  %v301 = vadd.f32 %v108, %v300
  %v302 = vpop.f32.mrb[0].mxu0
  %v303 = vadd.f32 %v112, %v302
  %v304 = vpop.f32.mrb[0].mxu0
  %v305 = vadd.f32 %v108, %v304
  %v306 = vpop.f32.mrb[0].mxu0
  %v307 = vadd.f32 %v112, %v306
  %308 = vmatprep.mubr.bf16.mxu0 0
  %309 = vmatmul.mubr.bf16.gmra.mrb[0].mxu0 %v152
  %v310 = vpop.f32.mrb[0].mxu0
  %v311 = vadd.f32 %v108, %v310
  %v312 = vpop.f32.mrb[0].mxu0
  %v313 = vadd.f32 %v112, %v312
  %v314 = vpop.f32.mrb[0].mxu0
  %v315 = vadd.f32 %v108, %v314
  %v316 = vpop.f32.mrb[0].mxu0
  %v317 = vadd.f32 %v112, %v316
  %318 = vmatprep.mubr.bf16.mxu0 0
  %319 = vmatmul.mubr.bf16.gmra.mrb[0].mxu0 %v155
  %v320 = vpop.f32.mrb[0].mxu0
  %v321 = vadd.f32 %v108, %v320
  %v322 = vpop.f32.mrb[0].mxu0
  %v323 = vadd.f32 %v112, %v322
  %v324 = vpop.f32.mrb[0].mxu0
  %v325 = vadd.f32 %v108, %v324
  %v326 = vpop.f32.mrb[0].mxu0
  %v327 = vadd.f32 %v112, %v326
  %328 = vmatprep.mubr.bf16.mxu0 0
  %329 = vmatmul.mubr.bf16.gmra.mrb[0].mxu0 %v158
  %v330 = vpop.f32.mrb[0].mxu0
  %v331 = vadd.f32 %v108, %v330
  %v332 = vpop.f32.mrb[0].mxu0
  %v333 = vadd.f32 %v112, %v332
  %v334 = vpop.f32.mrb[0].mxu0
  %v335 = vadd.f32 %v108, %v334
  %v336 = vpop.f32.mrb[0].mxu0
  %v337 = vadd.f32 %v112, %v336
  %338 = vmatprep.mubr.bf16.mxu0 0
  %339 = vmatmul.mubr.bf16.gmra.mrb[0].mxu0 %v161
  %v340 = vpop.f32.mrb[0].mxu0
  %v341 = vadd.f32 %v108, %v340
  %v342 = vpop.f32.mrb[0].mxu0
  %v343 = vadd.f32 %v112, %v342
  %v344 = vpop.f32.mrb[0].mxu0
  %v345 = vadd.f32 %v108, %v344
  %v346 = vpop.f32.mrb[0].mxu0
  %v347 = vadd.f32 %v112, %v346
  %348 = vmatprep.mubr.bf16.mxu0 0
  %349 = vmatmul.mubr.bf16.gmra.mrb[0].mxu0 %v164
  %v350 = vpop.f32.mrb[0].mxu0
  %v351 = vadd.f32 %v108, %v350
  %v352 = vpop.f32.mrb[0].mxu0
  %v353 = vadd.f32 %v112, %v352
  %v354 = vpop.f32.mrb[0].mxu0
  %v355 = vadd.f32 %v108, %v354
  %v356 = vpop.f32.mrb[0].mxu0
  %v357 = vadd.f32 %v112, %v356
  %358 = vmatprep.mubr.bf16.mxu0 0
  %359 = vmatmul.mubr.bf16.gmra.mrb[0].mxu0 %v167
  %v360 = vpop.f32.mrb[0].mxu0
  %v361 = vadd.f32 %v108, %v360
  %v362 = vpop.f32.mrb[0].mxu0
  %v363 = vadd.f32 %v112, %v362
  %v364 = vpop.f32.mrb[0].mxu0
  %v365 = vadd.f32 %v108, %v364
  %v366 = vpop.f32.mrb[0].mxu0
  %v367 = vadd.f32 %v112, %v366
  %368 = vdwg.mxu0
  %v369 = vmax.f32 %v211, 0.0
  %v370 = vmax.f32 %v213, 0.0
  %v371 = vmax.f32 %v215, 0.0
  %v372 = vmax.f32 %v217, 0.0
  %v373 = vmax.f32 %v221, 0.0
  %v374 = vmax.f32 %v223, 0.0
  %v375 = vmax.f32 %v225, 0.0
  %v376 = vmax.f32 %v227, 0.0
  %v377 = vmax.f32 %v231, 0.0
  %v378 = vmax.f32 %v233, 0.0
  %v379 = vmax.f32 %v235, 0.0
  %v380 = vmax.f32 %v237, 0.0
  %v381 = vmax.f32 %v241, 0.0
  %v382 = vmax.f32 %v243, 0.0
  %v383 = vmax.f32 %v245, 0.0
  %v384 = vmax.f32 %v247, 0.0
  %v385 = vmax.f32 %v251, 0.0
  %v386 = vmax.f32 %v253, 0.0
  %v387 = vmax.f32 %v255, 0.0
  %v388 = vmax.f32 %v257, 0.0
  %v389 = vmax.f32 %v261, 0.0
  %v390 = vmax.f32 %v263, 0.0
  %v391 = vmax.f32 %v265, 0.0
  %v392 = vmax.f32 %v267, 0.0
  %v393 = vmax.f32 %v271, 0.0
  %v394 = vmax.f32 %v273, 0.0
  %v395 = vmax.f32 %v275, 0.0
  %v396 = vmax.f32 %v277, 0.0
  %v397 = vmax.f32 %v281, 0.0
  %v398 = vmax.f32 %v283, 0.0
  %v399 = vmax.f32 %v285, 0.0
  %v400 = vmax.f32 %v287, 0.0
  %v401 = vmax.f32 %v291, 0.0
  %v402 = vmax.f32 %v293, 0.0
  %v403 = vmax.f32 %v295, 0.0
  %v404 = vmax.f32 %v297, 0.0
  %v405 = vmax.f32 %v301, 0.0
  %v406 = vmax.f32 %v303, 0.0
  %v407 = vmax.f32 %v305, 0.0
  %v408 = vmax.f32 %v307, 0.0
  %v409 = vmax.f32 %v311, 0.0
  %v410 = vmax.f32 %v313, 0.0
  %v411 = vmax.f32 %v315, 0.0
  %v412 = vmax.f32 %v317, 0.0
  %v413 = vmax.f32 %v321, 0.0
  %v414 = vmax.f32 %v323, 0.0
  %v415 = vmax.f32 %v325, 0.0
  %v416 = vmax.f32 %v327, 0.0
  %v417 = vmax.f32 %v331, 0.0
  %v418 = vmax.f32 %v333, 0.0
  %v419 = vmax.f32 %v335, 0.0
  %v420 = vmax.f32 %v337, 0.0
  %v421 = vmax.f32 %v341, 0.0
  %v422 = vmax.f32 %v343, 0.0
  %v423 = vmax.f32 %v345, 0.0
  %v424 = vmax.f32 %v347, 0.0
  %v425 = vmax.f32 %v351, 0.0
  %v426 = vmax.f32 %v353, 0.0
  %v427 = vmax.f32 %v355, 0.0
  %v428 = vmax.f32 %v357, 0.0
  %v429 = vmax.f32 %v361, 0.0
  %v430 = vmax.f32 %v363, 0.0
  %v431 = vmax.f32 %v365, 0.0
  %v432 = vmax.f32 %v367, 0.0
  %v433 = vpack.c.bf16 %v371, %v369
  %v434 = vpack.c.bf16 %v372, %v370
  %v435 = vpack.c.bf16 %v375, %v373
  %v436 = vpack.c.bf16 %v376, %v374
  %v437 = vpack.c.bf16 %v379, %v377
  %v438 = vpack.c.bf16 %v380, %v378
  %v439 = vpack.c.bf16 %v383, %v381
  %v440 = vpack.c.bf16 %v384, %v382
  %v441 = vpack.c.bf16 %v387, %v385
  %v442 = vpack.c.bf16 %v388, %v386
  %v443 = vpack.c.bf16 %v391, %v389
  %v444 = vpack.c.bf16 %v392, %v390
  %v445 = vpack.c.bf16 %v395, %v393
  %v446 = vpack.c.bf16 %v396, %v394
  %v447 = vpack.c.bf16 %v399, %v397
  %v448 = vpack.c.bf16 %v400, %v398
  %v449 = vpack.c.bf16 %v403, %v401
  %v450 = vpack.c.bf16 %v404, %v402
  %v451 = vpack.c.bf16 %v407, %v405
  %v452 = vpack.c.bf16 %v408, %v406
  %v453 = vpack.c.bf16 %v411, %v409
  %v454 = vpack.c.bf16 %v412, %v410
  %v455 = vpack.c.bf16 %v415, %v413
  %v456 = vpack.c.bf16 %v416, %v414
  %v457 = vpack.c.bf16 %v419, %v417
  %v458 = vpack.c.bf16 %v420, %v418
  %v459 = vpack.c.bf16 %v423, %v421
  %v460 = vpack.c.bf16 %v424, %v422
  %v461 = vpack.c.bf16 %v427, %v425
  %v462 = vpack.c.bf16 %v428, %v426
  %v463 = vpack.c.bf16 %v431, %v429
  %v464 = vpack.c.bf16 %v432, %v430
  %v465 = vld [vmem:[%s3] sm:$0xf]
  %v466 = vld [vmem:[%s3 + $0x4] sm:$0xf]
  %v467 = vld [vmem:[%s3 + $0x8] sm:$0xf]
  %v468 = vld [vmem:[%s3 + $0xc] sm:$0xf]
  %v469 = vld [vmem:[%s3 + $0x10] sm:$0xf]
  %v470 = vld [vmem:[%s3 + $0x14] sm:$0xf]
  %v471 = vld [vmem:[%s3 + $0x18] sm:$0xf]
  %v472 = vld [vmem:[%s3 + $0x1c] sm:$0xf]
  %v473 = vld [vmem:[%s3 + $0x20] sm:$0xf]
  %v474 = vld [vmem:[%s3 + $0x24] sm:$0xf]
  %v475 = vld [vmem:[%s3 + $0x28] sm:$0xf]
  %v476 = vld [vmem:[%s3 + $0x2c] sm:$0xf]
  %v477 = vld [vmem:[%s3 + $0x30] sm:$0xf]
  %v478 = vld [vmem:[%s3 + $0x34] sm:$0xf]
  %v479 = vld [vmem:[%s3 + $0x38] sm:$0xf]
  %v480 = vld [vmem:[%s3 + $0x3c] sm:$0xf]
  %v481 = vld [vmem:[%s3 + $0x40] sm:$0xf]
  %v482 = vld [vmem:[%s3 + $0x44] sm:$0xf]
  %v483 = vld [vmem:[%s3 + $0x48] sm:$0xf]
  %v484 = vld [vmem:[%s3 + $0x4c] sm:$0xf]
  %v485 = vld [vmem:[%s3 + $0x50] sm:$0xf]
  %v486 = vld [vmem:[%s3 + $0x54] sm:$0xf]
  %v487 = vld [vmem:[%s3 + $0x58] sm:$0xf]
  %v488 = vld [vmem:[%s3 + $0x5c] sm:$0xf]
  %v489 = vld [vmem:[%s3 + $0x60] sm:$0xf]
  %v490 = vld [vmem:[%s3 + $0x64] sm:$0xf]
  %v491 = vld [vmem:[%s3 + $0x68] sm:$0xf]
  %v492 = vld [vmem:[%s3 + $0x6c] sm:$0xf]
  %v493 = vld [vmem:[%s3 + $0x70] sm:$0xf]
  %v494 = vld [vmem:[%s3 + $0x74] sm:$0xf]
  %v495 = vld [vmem:[%s3 + $0x78] sm:$0xf]
  %v496 = vld [vmem:[%s3 + $0x7c] sm:$0xf]
  %v498 = vlaneseq
  %v499 = vshrl.u32 %v498, 7
  %v500 = vsub.s32 0, %v499
  %v501 = vrot.slane %v85, %v500
  %v535 = vunpack.c.l.b16 %v465
  %v536 = vunpack.c.l.b16 %v466
  %v537 = vunpack.c.l.b16 %v467
  %v538 = vunpack.c.l.b16 %v468
  %v539 = vunpack.c.l.b16 %v469
  %v540 = vunpack.c.l.b16 %v470
  %v541 = vunpack.c.l.b16 %v471
  %v542 = vunpack.c.l.b16 %v472
  %v543 = vunpack.c.l.b16 %v473
  %v544 = vunpack.c.l.b16 %v474
  %v545 = vunpack.c.l.b16 %v475
  %v546 = vunpack.c.l.b16 %v476
  %v547 = vunpack.c.l.b16 %v477
  %v548 = vunpack.c.l.b16 %v478
  %v549 = vunpack.c.l.b16 %v479
  %v550 = vunpack.c.l.b16 %v480
  %v551 = vunpack.c.l.b16 %v481
  %v552 = vunpack.c.l.b16 %v482
  %v553 = vunpack.c.l.b16 %v483
  %v554 = vunpack.c.l.b16 %v484
  %v555 = vunpack.c.l.b16 %v485
  %v556 = vunpack.c.l.b16 %v486
  %v557 = vunpack.c.l.b16 %v487
  %v558 = vunpack.c.l.b16 %v488
  %v559 = vunpack.c.l.b16 %v489
  %v560 = vunpack.c.l.b16 %v490
  %v561 = vunpack.c.l.b16 %v491
  %v562 = vunpack.c.l.b16 %v492
  %v563 = vunpack.c.l.b16 %v493
  %v564 = vunpack.c.l.b16 %v494
  %v565 = vunpack.c.l.b16 %v495
  %v566 = vunpack.c.l.b16 %v496
  %v567 = vpack.c.b16 %v536, %v535
  %v568 = vpack.c.b16 %v538, %v537
  %v569 = vpack.c.b16 %v540, %v539
  %v570 = vpack.c.b16 %v542, %v541
  %v571 = vpack.c.b16 %v544, %v543
  %v572 = vpack.c.b16 %v546, %v545
  %v573 = vpack.c.b16 %v548, %v547
  %v574 = vpack.c.b16 %v550, %v549
  %v575 = vpack.c.b16 %v552, %v551
  %v576 = vpack.c.b16 %v554, %v553
  %v577 = vpack.c.b16 %v556, %v555
  %v578 = vpack.c.b16 %v558, %v557
  %v579 = vpack.c.b16 %v560, %v559
  %v580 = vpack.c.b16 %v562, %v561
  %v581 = vpack.c.b16 %v564, %v563
  %v582 = vpack.c.b16 %v566, %v565
  %599 = vmatprep.subr.bf16.mxu0 0
  %600 = vmatpush1.bf16.msra.mxu0 %v567
  %601 = vmatprep.subr.bf16.mxu0 0
  %602 = vmatpush1.bf16.msra.mxu0 %v568
  %603 = vmatprep.subr.bf16.mxu0 0
  %604 = vmatpush1.bf16.msra.mxu0 %v569
  %605 = vmatprep.subr.bf16.mxu0 0
  %606 = vmatpush1.bf16.msra.mxu0 %v570
  %607 = vmatprep.subr.bf16.mxu0 0
  %608 = vmatpush1.bf16.msra.mxu0 %v571
  %609 = vmatprep.subr.bf16.mxu0 0
  %610 = vmatpush1.bf16.msra.mxu0 %v572
  %611 = vmatprep.subr.bf16.mxu0 0
  %612 = vmatpush1.bf16.msra.mxu0 %v573
  %613 = vmatprep.subr.bf16.mxu0 0
  %614 = vmatpush1.bf16.msra.mxu0 %v574
  %615 = vmatprep.subr.bf16.mxu0 0
  %616 = vmatpush1.bf16.msra.mxu0 %v575
  %617 = vmatprep.subr.bf16.mxu0 0
  %618 = vmatpush1.bf16.msra.mxu0 %v576
  %619 = vmatprep.subr.bf16.mxu0 0
  %620 = vmatpush1.bf16.msra.mxu0 %v577
  %621 = vmatprep.subr.bf16.mxu0 0
  %622 = vmatpush1.bf16.msra.mxu0 %v578
  %623 = vmatprep.subr.bf16.mxu0 0
  %624 = vmatpush1.bf16.msra.mxu0 %v579
  %625 = vmatprep.subr.bf16.mxu0 0
  %626 = vmatpush1.bf16.msra.mxu0 %v580
  %627 = vmatprep.subr.bf16.mxu0 0
  %628 = vmatpush1.bf16.msra.mxu0 %v581
  %629 = vmatprep.subr.bf16.mxu0 0
  %630 = vmatpush1.bf16.msra.mxu0 %v582
  %631 = vmatprep.mubr.bf16.mxu0 %v434
  %632 = vmatmul.mubr.bf16.gmra.mrb[0].mxu0 %v433
  %v633 = vpop.f32.mrb[0].mxu0
  %v634 = vadd.f32 %v501, %v633
  %v635 = vpop.f32.mrb[0].mxu0
  %v636 = vpop.f32.mrb[0].mxu0
  %v637 = vadd.f32 %v501, %v636
  %v638 = vpop.f32.mrb[0].mxu0
  %639 = vmatprep.mubr.bf16.mxu0 %v436
  %640 = vmatmul.mubr.bf16.gmra.mrb[0].mxu0 %v435
  %v641 = vpop.f32.mrb[0].mxu0
  %v642 = vadd.f32 %v501, %v641
  %v643 = vpop.f32.mrb[0].mxu0
  %v644 = vpop.f32.mrb[0].mxu0
  %v645 = vadd.f32 %v501, %v644
  %v646 = vpop.f32.mrb[0].mxu0
  %647 = vmatprep.mubr.bf16.mxu0 %v438
  %648 = vmatmul.mubr.bf16.gmra.mrb[0].mxu0 %v437
  %v649 = vpop.f32.mrb[0].mxu0
  %v650 = vadd.f32 %v501, %v649
  %v651 = vpop.f32.mrb[0].mxu0
  %v652 = vpop.f32.mrb[0].mxu0
  %v653 = vadd.f32 %v501, %v652
  %v654 = vpop.f32.mrb[0].mxu0
  %655 = vmatprep.mubr.bf16.mxu0 %v440
  %656 = vmatmul.mubr.bf16.gmra.mrb[0].mxu0 %v439
  %v657 = vpop.f32.mrb[0].mxu0
  %v658 = vadd.f32 %v501, %v657
  %v659 = vpop.f32.mrb[0].mxu0
  %v660 = vpop.f32.mrb[0].mxu0
  %v661 = vadd.f32 %v501, %v660
  %v662 = vpop.f32.mrb[0].mxu0
  %663 = vmatprep.mubr.bf16.mxu0 %v442
  %664 = vmatmul.mubr.bf16.gmra.mrb[0].mxu0 %v441
  %v665 = vpop.f32.mrb[0].mxu0
  %v666 = vadd.f32 %v501, %v665
  %v667 = vpop.f32.mrb[0].mxu0
  %v668 = vpop.f32.mrb[0].mxu0
  %v669 = vadd.f32 %v501, %v668
  %v670 = vpop.f32.mrb[0].mxu0
  %671 = vmatprep.mubr.bf16.mxu0 %v444
  %672 = vmatmul.mubr.bf16.gmra.mrb[0].mxu0 %v443
  %v673 = vpop.f32.mrb[0].mxu0
  %v674 = vadd.f32 %v501, %v673
  %v675 = vpop.f32.mrb[0].mxu0
  %v676 = vpop.f32.mrb[0].mxu0
  %v677 = vadd.f32 %v501, %v676
  %v678 = vpop.f32.mrb[0].mxu0
  %679 = vmatprep.mubr.bf16.mxu0 %v446
  %680 = vmatmul.mubr.bf16.gmra.mrb[0].mxu0 %v445
  %v681 = vpop.f32.mrb[0].mxu0
  %v682 = vadd.f32 %v501, %v681
  %v683 = vpop.f32.mrb[0].mxu0
  %v684 = vpop.f32.mrb[0].mxu0
  %v685 = vadd.f32 %v501, %v684
  %v686 = vpop.f32.mrb[0].mxu0
  %687 = vmatprep.mubr.bf16.mxu0 %v448
  %688 = vmatmul.mubr.bf16.gmra.mrb[0].mxu0 %v447
  %v689 = vpop.f32.mrb[0].mxu0
  %v690 = vadd.f32 %v501, %v689
  %v691 = vpop.f32.mrb[0].mxu0
  %v692 = vpop.f32.mrb[0].mxu0
  %v693 = vadd.f32 %v501, %v692
  %v694 = vpop.f32.mrb[0].mxu0
  %695 = vmatprep.mubr.bf16.mxu0 %v450
  %696 = vmatmul.mubr.bf16.gmra.mrb[0].mxu0 %v449
  %v697 = vpop.f32.mrb[0].mxu0
  %v698 = vadd.f32 %v501, %v697
  %v699 = vpop.f32.mrb[0].mxu0
  %v700 = vpop.f32.mrb[0].mxu0
  %v701 = vadd.f32 %v501, %v700
  %v702 = vpop.f32.mrb[0].mxu0
  %703 = vmatprep.mubr.bf16.mxu0 %v452
  %704 = vmatmul.mubr.bf16.gmra.mrb[0].mxu0 %v451
  %v705 = vpop.f32.mrb[0].mxu0
  %v706 = vadd.f32 %v501, %v705
  %v707 = vpop.f32.mrb[0].mxu0
  %v708 = vpop.f32.mrb[0].mxu0
  %v709 = vadd.f32 %v501, %v708
  %v710 = vpop.f32.mrb[0].mxu0
  %711 = vmatprep.mubr.bf16.mxu0 %v454
  %712 = vmatmul.mubr.bf16.gmra.mrb[0].mxu0 %v453
  %v713 = vpop.f32.mrb[0].mxu0
  %v714 = vadd.f32 %v501, %v713
  %v715 = vpop.f32.mrb[0].mxu0
  %v716 = vpop.f32.mrb[0].mxu0
  %v717 = vadd.f32 %v501, %v716
  %v718 = vpop.f32.mrb[0].mxu0
  %719 = vmatprep.mubr.bf16.mxu0 %v456
  %720 = vmatmul.mubr.bf16.gmra.mrb[0].mxu0 %v455
  %v721 = vpop.f32.mrb[0].mxu0
  %v722 = vadd.f32 %v501, %v721
  %v723 = vpop.f32.mrb[0].mxu0
  %v724 = vpop.f32.mrb[0].mxu0
  %v725 = vadd.f32 %v501, %v724
  %v726 = vpop.f32.mrb[0].mxu0
  %727 = vmatprep.mubr.bf16.mxu0 %v458
  %728 = vmatmul.mubr.bf16.gmra.mrb[0].mxu0 %v457
  %v729 = vpop.f32.mrb[0].mxu0
  %v730 = vadd.f32 %v501, %v729
  %v731 = vpop.f32.mrb[0].mxu0
  %v732 = vpop.f32.mrb[0].mxu0
  %v733 = vadd.f32 %v501, %v732
  %v734 = vpop.f32.mrb[0].mxu0
  %735 = vmatprep.mubr.bf16.mxu0 %v460
  %736 = vmatmul.mubr.bf16.gmra.mrb[0].mxu0 %v459
  %v737 = vpop.f32.mrb[0].mxu0
  %v738 = vadd.f32 %v501, %v737
  %v739 = vpop.f32.mrb[0].mxu0
  %v740 = vpop.f32.mrb[0].mxu0
  %v741 = vadd.f32 %v501, %v740
  %v742 = vpop.f32.mrb[0].mxu0
  %743 = vmatprep.mubr.bf16.mxu0 %v462
  %744 = vmatmul.mubr.bf16.gmra.mrb[0].mxu0 %v461
  %v745 = vpop.f32.mrb[0].mxu0
  %v746 = vadd.f32 %v501, %v745
  %v747 = vpop.f32.mrb[0].mxu0
  %v748 = vpop.f32.mrb[0].mxu0
  %v749 = vadd.f32 %v501, %v748
  %v750 = vpop.f32.mrb[0].mxu0
  %751 = vmatprep.mubr.bf16.mxu0 %v464
  %752 = vmatmul.mubr.bf16.gmra.mrb[0].mxu0 %v463
  %v753 = vpop.f32.mrb[0].mxu0
  %v754 = vadd.f32 %v501, %v753
  %v755 = vpop.f32.mrb[0].mxu0
  %v756 = vpop.f32.mrb[0].mxu0
  %v757 = vadd.f32 %v501, %v756
  %v758 = vpop.f32.mrb[0].mxu0
  %759 = vdwg.mxu0
  %v760 = vmax.f32 %v634, 0.0
  %v761 = vmax.f32 %v637, 0.0
  %v762 = vmax.f32 %v642, 0.0
  %v763 = vmax.f32 %v645, 0.0
  %v764 = vmax.f32 %v650, 0.0
  %v765 = vmax.f32 %v653, 0.0
  %v766 = vmax.f32 %v658, 0.0
  %v767 = vmax.f32 %v661, 0.0
  %v768 = vmax.f32 %v666, 0.0
  %v769 = vmax.f32 %v669, 0.0
  %v770 = vmax.f32 %v674, 0.0
  %v771 = vmax.f32 %v677, 0.0
  %v772 = vmax.f32 %v682, 0.0
  %v773 = vmax.f32 %v685, 0.0
  %v774 = vmax.f32 %v690, 0.0
  %v775 = vmax.f32 %v693, 0.0
  %v776 = vmax.f32 %v698, 0.0
  %v777 = vmax.f32 %v701, 0.0
  %v778 = vmax.f32 %v706, 0.0
  %v779 = vmax.f32 %v709, 0.0
  %v780 = vmax.f32 %v714, 0.0
  %v781 = vmax.f32 %v717, 0.0
  %v782 = vmax.f32 %v722, 0.0
  %v783 = vmax.f32 %v725, 0.0
  %v784 = vmax.f32 %v730, 0.0
  %v785 = vmax.f32 %v733, 0.0
  %v786 = vmax.f32 %v738, 0.0
  %v787 = vmax.f32 %v741, 0.0
  %v788 = vmax.f32 %v746, 0.0
  %v789 = vmax.f32 %v749, 0.0
  %v790 = vmax.f32 %v754, 0.0
  %v791 = vmax.f32 %v757, 0.0
  %v792 = vld [vmem:[%s6] sm:$0x3]
  %v793 = vpack.c.bf16 %v761, %v760
  %v794 = vpack.c.bf16 %v763, %v762
  %v795 = vpack.c.bf16 %v765, %v764
  %v796 = vpack.c.bf16 %v767, %v766
  %v797 = vpack.c.bf16 %v769, %v768
  %v798 = vpack.c.bf16 %v771, %v770
  %v799 = vpack.c.bf16 %v773, %v772
  %v800 = vpack.c.bf16 %v775, %v774
  %v801 = vpack.c.bf16 %v777, %v776
  %v802 = vpack.c.bf16 %v779, %v778
  %v803 = vpack.c.bf16 %v781, %v780
  %v804 = vpack.c.bf16 %v783, %v782
  %v805 = vpack.c.bf16 %v785, %v784
  %v806 = vpack.c.bf16 %v787, %v786
  %v807 = vpack.c.bf16 %v789, %v788
  %v808 = vpack.c.bf16 %v791, %v790
  %v809 = vld [vmem:[%s5] sm:$0xff]
  %v810 = vld [vmem:[%s5 + $0x8] sm:$0xff]
  %v811 = vld [vmem:[%s5 + $0x10] sm:$0xff]
  %v812 = vld [vmem:[%s5 + $0x18] sm:$0xff]
  %v813 = vld [vmem:[%s5 + $0x20] sm:$0xff]
  %v814 = vld [vmem:[%s5 + $0x28] sm:$0xff]
  %v815 = vld [vmem:[%s5 + $0x30] sm:$0xff]
  %v816 = vld [vmem:[%s5 + $0x38] sm:$0xff]
  %v817 = vld [vmem:[%s5 + $0x40] sm:$0xff]
  %v818 = vld [vmem:[%s5 + $0x48] sm:$0xff]
  %v819 = vld [vmem:[%s5 + $0x50] sm:$0xff]
  %v820 = vld [vmem:[%s5 + $0x58] sm:$0xff]
  %v821 = vld [vmem:[%s5 + $0x60] sm:$0xff]
  %v822 = vld [vmem:[%s5 + $0x68] sm:$0xff]
  %v823 = vld [vmem:[%s5 + $0x70] sm:$0xff]
  %v824 = vld [vmem:[%s5 + $0x78] sm:$0xff]
  %v826 = vlaneseq
  %v827 = vshrl.u32 %v826, 7
  %v828 = vsub.s32 0, %v827
  %v829 = vrot.slane %v792, %v828
  %v830 = vlaneseq
  %v831 = vshrl.u32 %v830, 7
  %v832 = vsub.s32 1, %v831
  %v833 = vrot.slane %v792, %v832
  %v852 = vunpack.c.l.b16 %v809
  %v853 = vunpack.c.h.b16 %v809
  %v854 = vunpack.c.l.b16 %v810
  %v855 = vunpack.c.h.b16 %v810
  %v856 = vunpack.c.l.b16 %v811
  %v857 = vunpack.c.h.b16 %v811
  %v858 = vunpack.c.l.b16 %v812
  %v859 = vunpack.c.h.b16 %v812
  %v860 = vunpack.c.l.b16 %v813
  %v861 = vunpack.c.h.b16 %v813
  %v862 = vunpack.c.l.b16 %v814
  %v863 = vunpack.c.h.b16 %v814
  %v864 = vunpack.c.l.b16 %v815
  %v865 = vunpack.c.h.b16 %v815
  %v866 = vunpack.c.l.b16 %v816
  %v867 = vunpack.c.h.b16 %v816
  %v868 = vunpack.c.l.b16 %v817
  %v869 = vunpack.c.h.b16 %v817
  %v870 = vunpack.c.l.b16 %v818
  %v871 = vunpack.c.h.b16 %v818
  %v872 = vunpack.c.l.b16 %v819
  %v873 = vunpack.c.h.b16 %v819
  %v874 = vunpack.c.l.b16 %v820
  %v875 = vunpack.c.h.b16 %v820
  %v876 = vunpack.c.l.b16 %v821
  %v877 = vunpack.c.h.b16 %v821
  %v878 = vunpack.c.l.b16 %v822
  %v879 = vunpack.c.h.b16 %v822
  %v880 = vunpack.c.l.b16 %v823
  %v881 = vunpack.c.h.b16 %v823
  %v882 = vunpack.c.l.b16 %v824
  %v883 = vunpack.c.h.b16 %v824
  %v884 = vpack.c.b16 %v854, %v852
  %v885 = vpack.c.b16 %v855, %v853
  %v886 = vpack.c.b16 %v858, %v856
  %v887 = vpack.c.b16 %v859, %v857
  %v888 = vpack.c.b16 %v862, %v860
  %v889 = vpack.c.b16 %v863, %v861
  %v890 = vpack.c.b16 %v866, %v864
  %v891 = vpack.c.b16 %v867, %v865
  %v892 = vpack.c.b16 %v870, %v868
  %v893 = vpack.c.b16 %v871, %v869
  %v894 = vpack.c.b16 %v874, %v872
  %v895 = vpack.c.b16 %v875, %v873
  %v896 = vpack.c.b16 %v878, %v876
  %v897 = vpack.c.b16 %v879, %v877
  %v898 = vpack.c.b16 %v882, %v880
  %v899 = vpack.c.b16 %v883, %v881
  %916 = vmatprep.subr.bf16.mxu0 %v885
  %917 = vmatpush1.bf16.msra.mxu0 %v884
  %918 = vmatprep.subr.bf16.mxu0 %v887
  %919 = vmatpush1.bf16.msra.mxu0 %v886
  %920 = vmatprep.subr.bf16.mxu0 %v889
  %921 = vmatpush1.bf16.msra.mxu0 %v888
  %922 = vmatprep.subr.bf16.mxu0 %v891
  %923 = vmatpush1.bf16.msra.mxu0 %v890
  %924 = vmatprep.subr.bf16.mxu0 %v893
  %925 = vmatpush1.bf16.msra.mxu0 %v892
  %926 = vmatprep.subr.bf16.mxu0 %v895
  %927 = vmatpush1.bf16.msra.mxu0 %v894
  %928 = vmatprep.subr.bf16.mxu0 %v897
  %929 = vmatpush1.bf16.msra.mxu0 %v896
  %930 = vmatprep.subr.bf16.mxu0 %v899
  %931 = vmatpush1.bf16.msra.mxu0 %v898
  %932 = vmatprep.subr.bf16.mxu0 0
  %933 = vmatpush1.bf16.msra.mxu0 0
  %934 = vmatprep.subr.bf16.mxu0 0
  %935 = vmatpush1.bf16.msra.mxu0 0
  %936 = vmatprep.subr.bf16.mxu0 0
  %937 = vmatpush1.bf16.msra.mxu0 0
  %938 = vmatprep.subr.bf16.mxu0 0
  %939 = vmatpush1.bf16.msra.mxu0 0
  %940 = vmatprep.subr.bf16.mxu0 0
  %941 = vmatpush1.bf16.msra.mxu0 0
  %942 = vmatprep.subr.bf16.mxu0 0
  %943 = vmatpush1.bf16.msra.mxu0 0
  %944 = vmatprep.subr.bf16.mxu0 0
  %945 = vmatpush1.bf16.msra.mxu0 0
  %946 = vmatprep.subr.bf16.mxu0 0
  %947 = vmatpush1.bf16.msra.mxu0 0
  %948 = vmatprep.mubr.bf16.mxu0 0
  %949 = vmatmul.mubr.bf16.gmra.mrb[0].mxu0 %v793
  %v950 = vpop.f32.mrb[0].mxu0
  %v951 = vadd.f32 %v829, %v950
  %v952 = vpop.f32.mrb[0].mxu0
  %v953 = vadd.f32 %v833, %v952
  %v954 = vpop.f32.mrb[0].mxu0
  %v955 = vadd.f32 %v829, %v954
  %v956 = vpop.f32.mrb[0].mxu0
  %v957 = vadd.f32 %v833, %v956
  %958 = vmatprep.mubr.bf16.mxu0 0
  %959 = vmatmul.mubr.bf16.gmra.mrb[0].mxu0 %v794
  %v960 = vpop.f32.mrb[0].mxu0
  %v961 = vadd.f32 %v829, %v960
  %v962 = vpop.f32.mrb[0].mxu0
  %v963 = vadd.f32 %v833, %v962
  %v964 = vpop.f32.mrb[0].mxu0
  %v965 = vadd.f32 %v829, %v964
  %v966 = vpop.f32.mrb[0].mxu0
  %v967 = vadd.f32 %v833, %v966
  %968 = vmatprep.mubr.bf16.mxu0 0
  %969 = vmatmul.mubr.bf16.gmra.mrb[0].mxu0 %v795
  %v970 = vpop.f32.mrb[0].mxu0
  %v971 = vadd.f32 %v829, %v970
  %v972 = vpop.f32.mrb[0].mxu0
  %v973 = vadd.f32 %v833, %v972
  %v974 = vpop.f32.mrb[0].mxu0
  %v975 = vadd.f32 %v829, %v974
  %v976 = vpop.f32.mrb[0].mxu0
  %v977 = vadd.f32 %v833, %v976
  %978 = vmatprep.mubr.bf16.mxu0 0
  %979 = vmatmul.mubr.bf16.gmra.mrb[0].mxu0 %v796
  %v980 = vpop.f32.mrb[0].mxu0
  %v981 = vadd.f32 %v829, %v980
  %v982 = vpop.f32.mrb[0].mxu0
  %v983 = vadd.f32 %v833, %v982
  %v984 = vpop.f32.mrb[0].mxu0
  %v985 = vadd.f32 %v829, %v984
  %v986 = vpop.f32.mrb[0].mxu0
  %v987 = vadd.f32 %v833, %v986
  %988 = vmatprep.mubr.bf16.mxu0 0
  %989 = vmatmul.mubr.bf16.gmra.mrb[0].mxu0 %v797
  %v990 = vpop.f32.mrb[0].mxu0
  %v991 = vadd.f32 %v829, %v990
  %v992 = vpop.f32.mrb[0].mxu0
  %v993 = vadd.f32 %v833, %v992
  %v994 = vpop.f32.mrb[0].mxu0
  %v995 = vadd.f32 %v829, %v994
  %v996 = vpop.f32.mrb[0].mxu0
  %v997 = vadd.f32 %v833, %v996
  %998 = vmatprep.mubr.bf16.mxu0 0
  %999 = vmatmul.mubr.bf16.gmra.mrb[0].mxu0 %v798
  %v1000 = vpop.f32.mrb[0].mxu0
  %v1001 = vadd.f32 %v829, %v1000
  %v1002 = vpop.f32.mrb[0].mxu0
  %v1003 = vadd.f32 %v833, %v1002
  %v1004 = vpop.f32.mrb[0].mxu0
  %v1005 = vadd.f32 %v829, %v1004
  %v1006 = vpop.f32.mrb[0].mxu0
  %v1007 = vadd.f32 %v833, %v1006
  %1008 = vmatprep.mubr.bf16.mxu0 0
  %1009 = vmatmul.mubr.bf16.gmra.mrb[0].mxu0 %v799
  %v1010 = vpop.f32.mrb[0].mxu0
  %v1011 = vadd.f32 %v829, %v1010
  %v1012 = vpop.f32.mrb[0].mxu0
  %v1013 = vadd.f32 %v833, %v1012
  %v1014 = vpop.f32.mrb[0].mxu0
  %v1015 = vadd.f32 %v829, %v1014
  %v1016 = vpop.f32.mrb[0].mxu0
  %v1017 = vadd.f32 %v833, %v1016
  %1018 = vmatprep.mubr.bf16.mxu0 0
  %1019 = vmatmul.mubr.bf16.gmra.mrb[0].mxu0 %v800
  %v1020 = vpop.f32.mrb[0].mxu0
  %v1021 = vadd.f32 %v829, %v1020
  %v1022 = vpop.f32.mrb[0].mxu0
  %v1023 = vadd.f32 %v833, %v1022
  %v1024 = vpop.f32.mrb[0].mxu0
  %v1025 = vadd.f32 %v829, %v1024
  %v1026 = vpop.f32.mrb[0].mxu0
  %v1027 = vadd.f32 %v833, %v1026
  %1028 = vmatprep.mubr.bf16.mxu0 0
  %1029 = vmatmul.mubr.bf16.gmra.mrb[0].mxu0 %v801
  %v1030 = vpop.f32.mrb[0].mxu0
  %v1031 = vadd.f32 %v829, %v1030
  %v1032 = vpop.f32.mrb[0].mxu0
  %v1033 = vadd.f32 %v833, %v1032
  %v1034 = vpop.f32.mrb[0].mxu0
  %v1035 = vadd.f32 %v829, %v1034
  %v1036 = vpop.f32.mrb[0].mxu0
  %v1037 = vadd.f32 %v833, %v1036
  %1038 = vmatprep.mubr.bf16.mxu0 0
  %1039 = vmatmul.mubr.bf16.gmra.mrb[0].mxu0 %v802
  %v1040 = vpop.f32.mrb[0].mxu0
  %v1041 = vadd.f32 %v829, %v1040
  %v1042 = vpop.f32.mrb[0].mxu0
  %v1043 = vadd.f32 %v833, %v1042
  %v1044 = vpop.f32.mrb[0].mxu0
  %v1045 = vadd.f32 %v829, %v1044
  %v1046 = vpop.f32.mrb[0].mxu0
  %v1047 = vadd.f32 %v833, %v1046
  %1048 = vmatprep.mubr.bf16.mxu0 0
  %1049 = vmatmul.mubr.bf16.gmra.mrb[0].mxu0 %v803
  %v1050 = vpop.f32.mrb[0].mxu0
  %v1051 = vadd.f32 %v829, %v1050
  %v1052 = vpop.f32.mrb[0].mxu0
  %v1053 = vadd.f32 %v833, %v1052
  %v1054 = vpop.f32.mrb[0].mxu0
  %v1055 = vadd.f32 %v829, %v1054
  %v1056 = vpop.f32.mrb[0].mxu0
  %v1057 = vadd.f32 %v833, %v1056
  %1058 = vmatprep.mubr.bf16.mxu0 0
  %1059 = vmatmul.mubr.bf16.gmra.mrb[0].mxu0 %v804
  %v1060 = vpop.f32.mrb[0].mxu0
  %v1061 = vadd.f32 %v829, %v1060
  %v1062 = vpop.f32.mrb[0].mxu0
  %v1063 = vadd.f32 %v833, %v1062
  %v1064 = vpop.f32.mrb[0].mxu0
  %v1065 = vadd.f32 %v829, %v1064
  %v1066 = vpop.f32.mrb[0].mxu0
  %v1067 = vadd.f32 %v833, %v1066
  %1068 = vmatprep.mubr.bf16.mxu0 0
  %1069 = vmatmul.mubr.bf16.gmra.mrb[0].mxu0 %v805
  %v1070 = vpop.f32.mrb[0].mxu0
  %v1071 = vadd.f32 %v829, %v1070
  %v1072 = vpop.f32.mrb[0].mxu0
  %v1073 = vadd.f32 %v833, %v1072
  %v1074 = vpop.f32.mrb[0].mxu0
  %v1075 = vadd.f32 %v829, %v1074
  %v1076 = vpop.f32.mrb[0].mxu0
  %v1077 = vadd.f32 %v833, %v1076
  %1078 = vmatprep.mubr.bf16.mxu0 0
  %1079 = vmatmul.mubr.bf16.gmra.mrb[0].mxu0 %v806
  %v1080 = vpop.f32.mrb[0].mxu0
  %v1081 = vadd.f32 %v829, %v1080
  %v1082 = vpop.f32.mrb[0].mxu0
  %v1083 = vadd.f32 %v833, %v1082
  %v1084 = vpop.f32.mrb[0].mxu0
  %v1085 = vadd.f32 %v829, %v1084
  %v1086 = vpop.f32.mrb[0].mxu0
  %v1087 = vadd.f32 %v833, %v1086
  %1088 = vmatprep.mubr.bf16.mxu0 0
  %1089 = vmatmul.mubr.bf16.gmra.mrb[0].mxu0 %v807
  %v1090 = vpop.f32.mrb[0].mxu0
  %v1091 = vadd.f32 %v829, %v1090
  %v1092 = vpop.f32.mrb[0].mxu0
  %v1093 = vadd.f32 %v833, %v1092
  %v1094 = vpop.f32.mrb[0].mxu0
  %v1095 = vadd.f32 %v829, %v1094
  %v1096 = vpop.f32.mrb[0].mxu0
  %v1097 = vadd.f32 %v833, %v1096
  %1098 = vmatprep.mubr.bf16.mxu0 0
  %1099 = vmatmul.mubr.bf16.gmra.mrb[0].mxu0 %v808
  %v1100 = vpop.f32.mrb[0].mxu0
  %v1101 = vadd.f32 %v829, %v1100
  %v1102 = vpop.f32.mrb[0].mxu0
  %v1103 = vadd.f32 %v833, %v1102
  %v1104 = vpop.f32.mrb[0].mxu0
  %v1105 = vadd.f32 %v829, %v1104
  %v1106 = vpop.f32.mrb[0].mxu0
  %v1107 = vadd.f32 %v833, %v1106
  %1108 = vdwg.mxu0
  %v1109 = vmax.f32 %v951, 0.0
  %v1110 = vmax.f32 %v953, 0.0
  %v1111 = vmax.f32 %v955, 0.0
  %v1112 = vmax.f32 %v957, 0.0
  %v1113 = vmax.f32 %v961, 0.0
  %v1114 = vmax.f32 %v963, 0.0
  %v1115 = vmax.f32 %v965, 0.0
  %v1116 = vmax.f32 %v967, 0.0
  %v1117 = vmax.f32 %v971, 0.0
  %v1118 = vmax.f32 %v973, 0.0
  %v1119 = vmax.f32 %v975, 0.0
  %v1120 = vmax.f32 %v977, 0.0
  %v1121 = vmax.f32 %v981, 0.0
  %v1122 = vmax.f32 %v983, 0.0
  %v1123 = vmax.f32 %v985, 0.0
  %v1124 = vmax.f32 %v987, 0.0
  %v1125 = vmax.f32 %v991, 0.0
  %v1126 = vmax.f32 %v993, 0.0
  %v1127 = vmax.f32 %v995, 0.0
  %v1128 = vmax.f32 %v997, 0.0
  %v1129 = vmax.f32 %v1001, 0.0
  %v1130 = vmax.f32 %v1003, 0.0
  %v1131 = vmax.f32 %v1005, 0.0
  %v1132 = vmax.f32 %v1007, 0.0
  %v1133 = vmax.f32 %v1011, 0.0
  %v1134 = vmax.f32 %v1013, 0.0
  %v1135 = vmax.f32 %v1015, 0.0
  %v1136 = vmax.f32 %v1017, 0.0
  %v1137 = vmax.f32 %v1021, 0.0
  %v1138 = vmax.f32 %v1023, 0.0
  %v1139 = vmax.f32 %v1025, 0.0
  %v1140 = vmax.f32 %v1027, 0.0
  %v1141 = vmax.f32 %v1031, 0.0
  %v1142 = vmax.f32 %v1033, 0.0
  %v1143 = vmax.f32 %v1035, 0.0
  %v1144 = vmax.f32 %v1037, 0.0
  %v1145 = vmax.f32 %v1041, 0.0
  %v1146 = vmax.f32 %v1043, 0.0
  %v1147 = vmax.f32 %v1045, 0.0
  %v1148 = vmax.f32 %v1047, 0.0
  %v1149 = vmax.f32 %v1051, 0.0
  %v1150 = vmax.f32 %v1053, 0.0
  %v1151 = vmax.f32 %v1055, 0.0
  %v1152 = vmax.f32 %v1057, 0.0
  %v1153 = vmax.f32 %v1061, 0.0
  %v1154 = vmax.f32 %v1063, 0.0
  %v1155 = vmax.f32 %v1065, 0.0
  %v1156 = vmax.f32 %v1067, 0.0
  %v1157 = vmax.f32 %v1071, 0.0
  %v1158 = vmax.f32 %v1073, 0.0
  %v1159 = vmax.f32 %v1075, 0.0
  %v1160 = vmax.f32 %v1077, 0.0
  %v1161 = vmax.f32 %v1081, 0.0
  %v1162 = vmax.f32 %v1083, 0.0
  %v1163 = vmax.f32 %v1085, 0.0
  %v1164 = vmax.f32 %v1087, 0.0
  %v1165 = vmax.f32 %v1091, 0.0
  %v1166 = vmax.f32 %v1093, 0.0
  %v1167 = vmax.f32 %v1095, 0.0
  %v1168 = vmax.f32 %v1097, 0.0
  %v1169 = vmax.f32 %v1101, 0.0
  %v1170 = vmax.f32 %v1103, 0.0
  %v1171 = vmax.f32 %v1105, 0.0
  %v1172 = vmax.f32 %v1107, 0.0
  %v1173 = vadd.f32 %v1109, %v369
  %v1174 = vadd.f32 %v1110, %v370
  %v1175 = vadd.f32 %v1111, %v371
  %v1176 = vadd.f32 %v1112, %v372
  %v1177 = vadd.f32 %v1113, %v373
  %v1178 = vadd.f32 %v1114, %v374
  %v1179 = vadd.f32 %v1115, %v375
  %v1180 = vadd.f32 %v1116, %v376
  %v1181 = vadd.f32 %v1117, %v377
  %v1182 = vadd.f32 %v1118, %v378
  %v1183 = vadd.f32 %v1119, %v379
  %v1184 = vadd.f32 %v1120, %v380
  %v1185 = vadd.f32 %v1121, %v381
  %v1186 = vadd.f32 %v1122, %v382
  %v1187 = vadd.f32 %v1123, %v383
  %v1188 = vadd.f32 %v1124, %v384
  %v1189 = vadd.f32 %v1125, %v385
  %v1190 = vadd.f32 %v1126, %v386
  %v1191 = vadd.f32 %v1127, %v387
  %v1192 = vadd.f32 %v1128, %v388
  %v1193 = vadd.f32 %v1129, %v389
  %v1194 = vadd.f32 %v1130, %v390
  %v1195 = vadd.f32 %v1131, %v391
  %v1196 = vadd.f32 %v1132, %v392
  %v1197 = vadd.f32 %v1133, %v393
  %v1198 = vadd.f32 %v1134, %v394
  %v1199 = vadd.f32 %v1135, %v395
  %v1200 = vadd.f32 %v1136, %v396
  %v1201 = vadd.f32 %v1137, %v397
  %v1202 = vadd.f32 %v1138, %v398
  %v1203 = vadd.f32 %v1139, %v399
  %v1204 = vadd.f32 %v1140, %v400
  %v1205 = vadd.f32 %v1141, %v401
  %v1206 = vadd.f32 %v1142, %v402
  %v1207 = vadd.f32 %v1143, %v403
  %v1208 = vadd.f32 %v1144, %v404
  %v1209 = vadd.f32 %v1145, %v405
  %v1210 = vadd.f32 %v1146, %v406
  %v1211 = vadd.f32 %v1147, %v407
  %v1212 = vadd.f32 %v1148, %v408
  %v1213 = vadd.f32 %v1149, %v409
  %v1214 = vadd.f32 %v1150, %v410
  %v1215 = vadd.f32 %v1151, %v411
  %v1216 = vadd.f32 %v1152, %v412
  %v1217 = vadd.f32 %v1153, %v413
  %v1218 = vadd.f32 %v1154, %v414
  %v1219 = vadd.f32 %v1155, %v415
  %v1220 = vadd.f32 %v1156, %v416
  %v1221 = vadd.f32 %v1157, %v417
  %v1222 = vadd.f32 %v1158, %v418
  %v1223 = vadd.f32 %v1159, %v419
  %v1224 = vadd.f32 %v1160, %v420
  %v1225 = vadd.f32 %v1161, %v421
  %v1226 = vadd.f32 %v1162, %v422
  %v1227 = vadd.f32 %v1163, %v423
  %v1228 = vadd.f32 %v1164, %v424
  %v1229 = vadd.f32 %v1165, %v425
  %v1230 = vadd.f32 %v1166, %v426
  %v1231 = vadd.f32 %v1167, %v427
  %v1232 = vadd.f32 %v1168, %v428
  %v1233 = vadd.f32 %v1169, %v429
  %v1234 = vadd.f32 %v1170, %v430
  %v1235 = vadd.f32 %v1171, %v431
  %v1236 = vadd.f32 %v1172, %v432
  %v1237 = vpack.c.bf16 %v1175, %v1173
  %v1238 = vpack.c.bf16 %v1176, %v1174
  %v1239 = vpack.c.bf16 %v1179, %v1177
  %v1240 = vpack.c.bf16 %v1180, %v1178
  %v1241 = vpack.c.bf16 %v1183, %v1181
  %v1242 = vpack.c.bf16 %v1184, %v1182
  %v1243 = vpack.c.bf16 %v1187, %v1185
  %v1244 = vpack.c.bf16 %v1188, %v1186
  %v1245 = vpack.c.bf16 %v1191, %v1189
  %v1246 = vpack.c.bf16 %v1192, %v1190
  %v1247 = vpack.c.bf16 %v1195, %v1193
  %v1248 = vpack.c.bf16 %v1196, %v1194
  %v1249 = vpack.c.bf16 %v1199, %v1197
  %v1250 = vpack.c.bf16 %v1200, %v1198
  %v1251 = vpack.c.bf16 %v1203, %v1201
  %v1252 = vpack.c.bf16 %v1204, %v1202
  %v1253 = vpack.c.bf16 %v1207, %v1205
  %v1254 = vpack.c.bf16 %v1208, %v1206
  %v1255 = vpack.c.bf16 %v1211, %v1209
  %v1256 = vpack.c.bf16 %v1212, %v1210
  %v1257 = vpack.c.bf16 %v1215, %v1213
  %v1258 = vpack.c.bf16 %v1216, %v1214
  %v1259 = vpack.c.bf16 %v1219, %v1217
  %v1260 = vpack.c.bf16 %v1220, %v1218
  %v1261 = vpack.c.bf16 %v1223, %v1221
  %v1262 = vpack.c.bf16 %v1224, %v1222
  %v1263 = vpack.c.bf16 %v1227, %v1225
  %v1264 = vpack.c.bf16 %v1228, %v1226
  %v1265 = vpack.c.bf16 %v1231, %v1229
  %v1266 = vpack.c.bf16 %v1232, %v1230
  %v1267 = vpack.c.bf16 %v1235, %v1233
  %v1268 = vpack.c.bf16 %v1236, %v1234
  %1269 = vmatprep.subr.bf16.mxu0 0
  %1270 = vmatpush1.bf16.msra.mxu0 %v567
  %1271 = vmatprep.subr.bf16.mxu0 0
  %1272 = vmatpush1.bf16.msra.mxu0 %v568
  %1273 = vmatprep.subr.bf16.mxu0 0
  %1274 = vmatpush1.bf16.msra.mxu0 %v569
  %1275 = vmatprep.subr.bf16.mxu0 0
  %1276 = vmatpush1.bf16.msra.mxu0 %v570
  %1277 = vmatprep.subr.bf16.mxu0 0
  %1278 = vmatpush1.bf16.msra.mxu0 %v571
  %1279 = vmatprep.subr.bf16.mxu0 0
  %1280 = vmatpush1.bf16.msra.mxu0 %v572
  %1281 = vmatprep.subr.bf16.mxu0 0
  %1282 = vmatpush1.bf16.msra.mxu0 %v573
  %1283 = vmatprep.subr.bf16.mxu0 0
  %1284 = vmatpush1.bf16.msra.mxu0 %v574
  %1285 = vmatprep.subr.bf16.mxu0 0
  %1286 = vmatpush1.bf16.msra.mxu0 %v575
  %1287 = vmatprep.subr.bf16.mxu0 0
  %1288 = vmatpush1.bf16.msra.mxu0 %v576
  %1289 = vmatprep.subr.bf16.mxu0 0
  %1290 = vmatpush1.bf16.msra.mxu0 %v577
  %1291 = vmatprep.subr.bf16.mxu0 0
  %1292 = vmatpush1.bf16.msra.mxu0 %v578
  %1293 = vmatprep.subr.bf16.mxu0 0
  %1294 = vmatpush1.bf16.msra.mxu0 %v579
  %1295 = vmatprep.subr.bf16.mxu0 0
  %1296 = vmatpush1.bf16.msra.mxu0 %v580
  %1297 = vmatprep.subr.bf16.mxu0 0
  %1298 = vmatpush1.bf16.msra.mxu0 %v581
  %1299 = vmatprep.subr.bf16.mxu0 0
  %1300 = vmatpush1.bf16.msra.mxu0 %v582
  %1301 = vmatprep.mubr.bf16.mxu0 %v1238
  %1302 = vmatmul.mubr.bf16.gmra.mrb[0].mxu0 %v1237
  %v1303 = vpop.f32.mrb[0].mxu0
  %v1304 = vadd.f32 %v501, %v1303
  %v1305 = vpop.f32.mrb[0].mxu0
  %v1306 = vpop.f32.mrb[0].mxu0
  %v1307 = vadd.f32 %v501, %v1306
  %v1308 = vpop.f32.mrb[0].mxu0
  %1309 = vmatprep.mubr.bf16.mxu0 %v1240
  %1310 = vmatmul.mubr.bf16.gmra.mrb[0].mxu0 %v1239
  %v1311 = vpop.f32.mrb[0].mxu0
  %v1312 = vadd.f32 %v501, %v1311
  %v1313 = vpop.f32.mrb[0].mxu0
  %v1314 = vpop.f32.mrb[0].mxu0
  %v1315 = vadd.f32 %v501, %v1314
  %v1316 = vpop.f32.mrb[0].mxu0
  %1317 = vmatprep.mubr.bf16.mxu0 %v1242
  %1318 = vmatmul.mubr.bf16.gmra.mrb[0].mxu0 %v1241
  %v1319 = vpop.f32.mrb[0].mxu0
  %v1320 = vadd.f32 %v501, %v1319
  %v1321 = vpop.f32.mrb[0].mxu0
  %v1322 = vpop.f32.mrb[0].mxu0
  %v1323 = vadd.f32 %v501, %v1322
  %v1324 = vpop.f32.mrb[0].mxu0
  %1325 = vmatprep.mubr.bf16.mxu0 %v1244
  %1326 = vmatmul.mubr.bf16.gmra.mrb[0].mxu0 %v1243
  %v1327 = vpop.f32.mrb[0].mxu0
  %v1328 = vadd.f32 %v501, %v1327
  %v1329 = vpop.f32.mrb[0].mxu0
  %v1330 = vpop.f32.mrb[0].mxu0
  %v1331 = vadd.f32 %v501, %v1330
  %v1332 = vpop.f32.mrb[0].mxu0
  %1333 = vmatprep.mubr.bf16.mxu0 %v1246
  %1334 = vmatmul.mubr.bf16.gmra.mrb[0].mxu0 %v1245
  %v1335 = vpop.f32.mrb[0].mxu0
  %v1336 = vadd.f32 %v501, %v1335
  %v1337 = vpop.f32.mrb[0].mxu0
  %v1338 = vpop.f32.mrb[0].mxu0
  %v1339 = vadd.f32 %v501, %v1338
  %v1340 = vpop.f32.mrb[0].mxu0
  %1341 = vmatprep.mubr.bf16.mxu0 %v1248
  %1342 = vmatmul.mubr.bf16.gmra.mrb[0].mxu0 %v1247
  %v1343 = vpop.f32.mrb[0].mxu0
  %v1344 = vadd.f32 %v501, %v1343
  %v1345 = vpop.f32.mrb[0].mxu0
  %v1346 = vpop.f32.mrb[0].mxu0
  %v1347 = vadd.f32 %v501, %v1346
  %v1348 = vpop.f32.mrb[0].mxu0
  %1349 = vmatprep.mubr.bf16.mxu0 %v1250
  %1350 = vmatmul.mubr.bf16.gmra.mrb[0].mxu0 %v1249
  %v1351 = vpop.f32.mrb[0].mxu0
  %v1352 = vadd.f32 %v501, %v1351
  %v1353 = vpop.f32.mrb[0].mxu0
  %v1354 = vpop.f32.mrb[0].mxu0
  %v1355 = vadd.f32 %v501, %v1354
  %v1356 = vpop.f32.mrb[0].mxu0
  %1357 = vmatprep.mubr.bf16.mxu0 %v1252
  %1358 = vmatmul.mubr.bf16.gmra.mrb[0].mxu0 %v1251
  %v1359 = vpop.f32.mrb[0].mxu0
  %v1360 = vadd.f32 %v501, %v1359
  %v1361 = vpop.f32.mrb[0].mxu0
  %v1362 = vpop.f32.mrb[0].mxu0
  %v1363 = vadd.f32 %v501, %v1362
  %v1364 = vpop.f32.mrb[0].mxu0
  %1365 = vmatprep.mubr.bf16.mxu0 %v1254
  %1366 = vmatmul.mubr.bf16.gmra.mrb[0].mxu0 %v1253
  %v1367 = vpop.f32.mrb[0].mxu0
  %v1368 = vadd.f32 %v501, %v1367
  %v1369 = vpop.f32.mrb[0].mxu0
  %v1370 = vpop.f32.mrb[0].mxu0
  %v1371 = vadd.f32 %v501, %v1370
  %v1372 = vpop.f32.mrb[0].mxu0
  %1373 = vmatprep.mubr.bf16.mxu0 %v1256
  %1374 = vmatmul.mubr.bf16.gmra.mrb[0].mxu0 %v1255
  %v1375 = vpop.f32.mrb[0].mxu0
  %v1376 = vadd.f32 %v501, %v1375
  %v1377 = vpop.f32.mrb[0].mxu0
  %v1378 = vpop.f32.mrb[0].mxu0
  %v1379 = vadd.f32 %v501, %v1378
  %v1380 = vpop.f32.mrb[0].mxu0
  %1381 = vmatprep.mubr.bf16.mxu0 %v1258
  %1382 = vmatmul.mubr.bf16.gmra.mrb[0].mxu0 %v1257
  %v1383 = vpop.f32.mrb[0].mxu0
  %v1384 = vadd.f32 %v501, %v1383
  %v1385 = vpop.f32.mrb[0].mxu0
  %v1386 = vpop.f32.mrb[0].mxu0
  %v1387 = vadd.f32 %v501, %v1386
  %v1388 = vpop.f32.mrb[0].mxu0
  %1389 = vmatprep.mubr.bf16.mxu0 %v1260
  %1390 = vmatmul.mubr.bf16.gmra.mrb[0].mxu0 %v1259
  %v1391 = vpop.f32.mrb[0].mxu0
  %v1392 = vadd.f32 %v501, %v1391
  %v1393 = vpop.f32.mrb[0].mxu0
  %v1394 = vpop.f32.mrb[0].mxu0
  %v1395 = vadd.f32 %v501, %v1394
  %v1396 = vpop.f32.mrb[0].mxu0
  %1397 = vmatprep.mubr.bf16.mxu0 %v1262
  %1398 = vmatmul.mubr.bf16.gmra.mrb[0].mxu0 %v1261
  %v1399 = vpop.f32.mrb[0].mxu0
  %v1400 = vadd.f32 %v501, %v1399
  %v1401 = vpop.f32.mrb[0].mxu0
  %v1402 = vpop.f32.mrb[0].mxu0
  %v1403 = vadd.f32 %v501, %v1402
  %v1404 = vpop.f32.mrb[0].mxu0
  %1405 = vmatprep.mubr.bf16.mxu0 %v1264
  %1406 = vmatmul.mubr.bf16.gmra.mrb[0].mxu0 %v1263
  %v1407 = vpop.f32.mrb[0].mxu0
  %v1408 = vadd.f32 %v501, %v1407
  %v1409 = vpop.f32.mrb[0].mxu0
  %v1410 = vpop.f32.mrb[0].mxu0
  %v1411 = vadd.f32 %v501, %v1410
  %v1412 = vpop.f32.mrb[0].mxu0
  %1413 = vmatprep.mubr.bf16.mxu0 %v1266
  %1414 = vmatmul.mubr.bf16.gmra.mrb[0].mxu0 %v1265
  %v1415 = vpop.f32.mrb[0].mxu0
  %v1416 = vadd.f32 %v501, %v1415
  %v1417 = vpop.f32.mrb[0].mxu0
  %v1418 = vpop.f32.mrb[0].mxu0
  %v1419 = vadd.f32 %v501, %v1418
  %v1420 = vpop.f32.mrb[0].mxu0
  %1421 = vmatprep.mubr.bf16.mxu0 %v1268
  %1422 = vmatmul.mubr.bf16.gmra.mrb[0].mxu0 %v1267
  %v1423 = vpop.f32.mrb[0].mxu0
  %v1424 = vadd.f32 %v501, %v1423
  %v1425 = vpop.f32.mrb[0].mxu0
  %v1426 = vpop.f32.mrb[0].mxu0
  %v1427 = vadd.f32 %v501, %v1426
  %v1428 = vpop.f32.mrb[0].mxu0
  %1429 = vdwg.mxu0
  %v1430 = vmax.f32 %v1304, 0.0
  %v1431 = vmax.f32 %v1307, 0.0
  %v1432 = vmax.f32 %v1312, 0.0
  %v1433 = vmax.f32 %v1315, 0.0
  %v1434 = vmax.f32 %v1320, 0.0
  %v1435 = vmax.f32 %v1323, 0.0
  %v1436 = vmax.f32 %v1328, 0.0
  %v1437 = vmax.f32 %v1331, 0.0
  %v1438 = vmax.f32 %v1336, 0.0
  %v1439 = vmax.f32 %v1339, 0.0
  %v1440 = vmax.f32 %v1344, 0.0
  %v1441 = vmax.f32 %v1347, 0.0
  %v1442 = vmax.f32 %v1352, 0.0
  %v1443 = vmax.f32 %v1355, 0.0
  %v1444 = vmax.f32 %v1360, 0.0
  %v1445 = vmax.f32 %v1363, 0.0
  %v1446 = vmax.f32 %v1368, 0.0
  %v1447 = vmax.f32 %v1371, 0.0
  %v1448 = vmax.f32 %v1376, 0.0
  %v1449 = vmax.f32 %v1379, 0.0
  %v1450 = vmax.f32 %v1384, 0.0
  %v1451 = vmax.f32 %v1387, 0.0
  %v1452 = vmax.f32 %v1392, 0.0
  %v1453 = vmax.f32 %v1395, 0.0
  %v1454 = vmax.f32 %v1400, 0.0
  %v1455 = vmax.f32 %v1403, 0.0
  %v1456 = vmax.f32 %v1408, 0.0
  %v1457 = vmax.f32 %v1411, 0.0
  %v1458 = vmax.f32 %v1416, 0.0
  %v1459 = vmax.f32 %v1419, 0.0
  %v1460 = vmax.f32 %v1424, 0.0
  %v1461 = vmax.f32 %v1427, 0.0
  %v1462 = vld [vmem:[%s8] sm:$0x1]
  %v1463 = vpack.c.bf16 %v1431, %v1430
  %v1464 = vpack.c.bf16 %v1433, %v1432
  %v1465 = vpack.c.bf16 %v1435, %v1434
  %v1466 = vpack.c.bf16 %v1437, %v1436
  %v1467 = vpack.c.bf16 %v1439, %v1438
  %v1468 = vpack.c.bf16 %v1441, %v1440
  %v1469 = vpack.c.bf16 %v1443, %v1442
  %v1470 = vpack.c.bf16 %v1445, %v1444
  %v1471 = vpack.c.bf16 %v1447, %v1446
  %v1472 = vpack.c.bf16 %v1449, %v1448
  %v1473 = vpack.c.bf16 %v1451, %v1450
  %v1474 = vpack.c.bf16 %v1453, %v1452
  %v1475 = vpack.c.bf16 %v1455, %v1454
  %v1476 = vpack.c.bf16 %v1457, %v1456
  %v1477 = vpack.c.bf16 %v1459, %v1458
  %v1478 = vpack.c.bf16 %v1461, %v1460
  %v1479 = vld [vmem:[%s7] sm:$0xf]
  %v1480 = vld [vmem:[%s7 + $0x4] sm:$0xf]
  %v1481 = vld [vmem:[%s7 + $0x8] sm:$0xf]
  %v1482 = vld [vmem:[%s7 + $0xc] sm:$0xf]
  %v1483 = vld [vmem:[%s7 + $0x10] sm:$0xf]
  %v1484 = vld [vmem:[%s7 + $0x14] sm:$0xf]
  %v1485 = vld [vmem:[%s7 + $0x18] sm:$0xf]
  %v1486 = vld [vmem:[%s7 + $0x1c] sm:$0xf]
  %v1487 = vld [vmem:[%s7 + $0x20] sm:$0xf]
  %v1488 = vld [vmem:[%s7 + $0x24] sm:$0xf]
  %v1489 = vld [vmem:[%s7 + $0x28] sm:$0xf]
  %v1490 = vld [vmem:[%s7 + $0x2c] sm:$0xf]
  %v1491 = vld [vmem:[%s7 + $0x30] sm:$0xf]
  %v1492 = vld [vmem:[%s7 + $0x34] sm:$0xf]
  %v1493 = vld [vmem:[%s7 + $0x38] sm:$0xf]
  %v1494 = vld [vmem:[%s7 + $0x3c] sm:$0xf]
  %v1496 = vlaneseq
  %v1497 = vshrl.u32 %v1496, 7
  %v1498 = vsub.s32 0, %v1497
  %v1499 = vrot.slane %v1462, %v1498
  %v1517 = vunpack.c.l.b16 %v1479
  %v1518 = vunpack.c.l.b16 %v1480
  %v1519 = vunpack.c.l.b16 %v1481
  %v1520 = vunpack.c.l.b16 %v1482
  %v1521 = vunpack.c.l.b16 %v1483
  %v1522 = vunpack.c.l.b16 %v1484
  %v1523 = vunpack.c.l.b16 %v1485
  %v1524 = vunpack.c.l.b16 %v1486
  %v1525 = vunpack.c.l.b16 %v1487
  %v1526 = vunpack.c.l.b16 %v1488
  %v1527 = vunpack.c.l.b16 %v1489
  %v1528 = vunpack.c.l.b16 %v1490
  %v1529 = vunpack.c.l.b16 %v1491
  %v1530 = vunpack.c.l.b16 %v1492
  %v1531 = vunpack.c.l.b16 %v1493
  %v1532 = vunpack.c.l.b16 %v1494
  %v1533 = vpack.c.b16 %v1518, %v1517
  %v1534 = vpack.c.b16 %v1520, %v1519
  %v1535 = vpack.c.b16 %v1522, %v1521
  %v1536 = vpack.c.b16 %v1524, %v1523
  %v1537 = vpack.c.b16 %v1526, %v1525
  %v1538 = vpack.c.b16 %v1528, %v1527
  %v1539 = vpack.c.b16 %v1530, %v1529
  %v1540 = vpack.c.b16 %v1532, %v1531
  %1549 = vmatprep.subr.bf16.mxu0 0
  %1550 = vmatpush1.bf16.msra.mxu0 %v1533
  %1551 = vmatprep.subr.bf16.mxu0 0
  %1552 = vmatpush1.bf16.msra.mxu0 %v1534
  %1553 = vmatprep.subr.bf16.mxu0 0
  %1554 = vmatpush1.bf16.msra.mxu0 %v1535
  %1555 = vmatprep.subr.bf16.mxu0 0
  %1556 = vmatpush1.bf16.msra.mxu0 %v1536
  %1557 = vmatprep.subr.bf16.mxu0 0
  %1558 = vmatpush1.bf16.msra.mxu0 %v1537
  %1559 = vmatprep.subr.bf16.mxu0 0
  %1560 = vmatpush1.bf16.msra.mxu0 %v1538
  %1561 = vmatprep.subr.bf16.mxu0 0
  %1562 = vmatpush1.bf16.msra.mxu0 %v1539
  %1563 = vmatprep.subr.bf16.mxu0 0
  %1564 = vmatpush1.bf16.msra.mxu0 %v1540
  %1565 = vmatprep.subr.bf16.mxu0 0
  %1566 = vmatpush1.bf16.msra.mxu0 0
  %1567 = vmatprep.subr.bf16.mxu0 0
  %1568 = vmatpush1.bf16.msra.mxu0 0
  %1569 = vmatprep.subr.bf16.mxu0 0
  %1570 = vmatpush1.bf16.msra.mxu0 0
  %1571 = vmatprep.subr.bf16.mxu0 0
  %1572 = vmatpush1.bf16.msra.mxu0 0
  %1573 = vmatprep.subr.bf16.mxu0 0
  %1574 = vmatpush1.bf16.msra.mxu0 0
  %1575 = vmatprep.subr.bf16.mxu0 0
  %1576 = vmatpush1.bf16.msra.mxu0 0
  %1577 = vmatprep.subr.bf16.mxu0 0
  %1578 = vmatpush1.bf16.msra.mxu0 0
  %1579 = vmatprep.subr.bf16.mxu0 0
  %1580 = vmatpush1.bf16.msra.mxu0 0
  %1581 = vmatprep.mubr.bf16.mxu0 0
  %1582 = vmatmul.mubr.bf16.gmra.mrb[0].mxu0 %v1463
  %v1583 = vpop.f32.mrb[0].mxu0
  %v1584 = vadd.f32 %v1499, %v1583
  %v1585 = vpop.f32.mrb[0].mxu0
  %v1586 = vpop.f32.mrb[0].mxu0
  %v1587 = vadd.f32 %v1499, %v1586
  %v1588 = vpop.f32.mrb[0].mxu0
  %1589 = vmatprep.mubr.bf16.mxu0 0
  %1590 = vmatmul.mubr.bf16.gmra.mrb[0].mxu0 %v1464
  %v1591 = vpop.f32.mrb[0].mxu0
  %v1592 = vadd.f32 %v1499, %v1591
  %v1593 = vpop.f32.mrb[0].mxu0
  %v1594 = vpop.f32.mrb[0].mxu0
  %v1595 = vadd.f32 %v1499, %v1594
  %v1596 = vpop.f32.mrb[0].mxu0
  %1597 = vmatprep.mubr.bf16.mxu0 0
  %1598 = vmatmul.mubr.bf16.gmra.mrb[0].mxu0 %v1465
  %v1599 = vpop.f32.mrb[0].mxu0
  %v1600 = vadd.f32 %v1499, %v1599
  %v1601 = vpop.f32.mrb[0].mxu0
  %v1602 = vpop.f32.mrb[0].mxu0
  %v1603 = vadd.f32 %v1499, %v1602
  %v1604 = vpop.f32.mrb[0].mxu0
  %1605 = vmatprep.mubr.bf16.mxu0 0
  %1606 = vmatmul.mubr.bf16.gmra.mrb[0].mxu0 %v1466
  %v1607 = vpop.f32.mrb[0].mxu0
  %v1608 = vadd.f32 %v1499, %v1607
  %v1609 = vpop.f32.mrb[0].mxu0
  %v1610 = vpop.f32.mrb[0].mxu0
  %v1611 = vadd.f32 %v1499, %v1610
  %v1612 = vpop.f32.mrb[0].mxu0
  %1613 = vmatprep.mubr.bf16.mxu0 0
  %1614 = vmatmul.mubr.bf16.gmra.mrb[0].mxu0 %v1467
  %v1615 = vpop.f32.mrb[0].mxu0
  %v1616 = vadd.f32 %v1499, %v1615
  %v1617 = vpop.f32.mrb[0].mxu0
  %v1618 = vpop.f32.mrb[0].mxu0
  %v1619 = vadd.f32 %v1499, %v1618
  %v1620 = vpop.f32.mrb[0].mxu0
  %1621 = vmatprep.mubr.bf16.mxu0 0
  %1622 = vmatmul.mubr.bf16.gmra.mrb[0].mxu0 %v1468
  %v1623 = vpop.f32.mrb[0].mxu0
  %v1624 = vadd.f32 %v1499, %v1623
  %v1625 = vpop.f32.mrb[0].mxu0
  %v1626 = vpop.f32.mrb[0].mxu0
  %v1627 = vadd.f32 %v1499, %v1626
  %v1628 = vpop.f32.mrb[0].mxu0
  %1629 = vmatprep.mubr.bf16.mxu0 0
  %1630 = vmatmul.mubr.bf16.gmra.mrb[0].mxu0 %v1469
  %v1631 = vpop.f32.mrb[0].mxu0
  %v1632 = vadd.f32 %v1499, %v1631
  %v1633 = vpop.f32.mrb[0].mxu0
  %v1634 = vpop.f32.mrb[0].mxu0
  %v1635 = vadd.f32 %v1499, %v1634
  %v1636 = vpop.f32.mrb[0].mxu0
  %1637 = vmatprep.mubr.bf16.mxu0 0
  %1638 = vmatmul.mubr.bf16.gmra.mrb[0].mxu0 %v1470
  %v1639 = vpop.f32.mrb[0].mxu0
  %v1640 = vadd.f32 %v1499, %v1639
  %v1641 = vpop.f32.mrb[0].mxu0
  %v1642 = vpop.f32.mrb[0].mxu0
  %v1643 = vadd.f32 %v1499, %v1642
  %v1644 = vpop.f32.mrb[0].mxu0
  %1645 = vmatprep.mubr.bf16.mxu0 0
  %1646 = vmatmul.mubr.bf16.gmra.mrb[0].mxu0 %v1471
  %v1647 = vpop.f32.mrb[0].mxu0
  %v1648 = vadd.f32 %v1499, %v1647
  %v1649 = vpop.f32.mrb[0].mxu0
  %v1650 = vpop.f32.mrb[0].mxu0
  %v1651 = vadd.f32 %v1499, %v1650
  %v1652 = vpop.f32.mrb[0].mxu0
  %1653 = vmatprep.mubr.bf16.mxu0 0
  %1654 = vmatmul.mubr.bf16.gmra.mrb[0].mxu0 %v1472
  %v1655 = vpop.f32.mrb[0].mxu0
  %v1656 = vadd.f32 %v1499, %v1655
  %v1657 = vpop.f32.mrb[0].mxu0
  %v1658 = vpop.f32.mrb[0].mxu0
  %v1659 = vadd.f32 %v1499, %v1658
  %v1660 = vpop.f32.mrb[0].mxu0
  %1661 = vmatprep.mubr.bf16.mxu0 0
  %1662 = vmatmul.mubr.bf16.gmra.mrb[0].mxu0 %v1473
  %v1663 = vpop.f32.mrb[0].mxu0
  %v1664 = vadd.f32 %v1499, %v1663
  %v1665 = vpop.f32.mrb[0].mxu0
  %v1666 = vpop.f32.mrb[0].mxu0
  %v1667 = vadd.f32 %v1499, %v1666
  %v1668 = vpop.f32.mrb[0].mxu0
  %1669 = vmatprep.mubr.bf16.mxu0 0
  %1670 = vmatmul.mubr.bf16.gmra.mrb[0].mxu0 %v1474
  %v1671 = vpop.f32.mrb[0].mxu0
  %v1672 = vadd.f32 %v1499, %v1671
  %v1673 = vpop.f32.mrb[0].mxu0
  %v1674 = vpop.f32.mrb[0].mxu0
  %v1675 = vadd.f32 %v1499, %v1674
  %v1676 = vpop.f32.mrb[0].mxu0
  %1677 = vmatprep.mubr.bf16.mxu0 0
  %1678 = vmatmul.mubr.bf16.gmra.mrb[0].mxu0 %v1475
  %v1679 = vpop.f32.mrb[0].mxu0
  %v1680 = vadd.f32 %v1499, %v1679
  %v1681 = vpop.f32.mrb[0].mxu0
  %v1682 = vpop.f32.mrb[0].mxu0
  %v1683 = vadd.f32 %v1499, %v1682
  %v1684 = vpop.f32.mrb[0].mxu0
  %1685 = vmatprep.mubr.bf16.mxu0 0
  %1686 = vmatmul.mubr.bf16.gmra.mrb[0].mxu0 %v1476
  %v1687 = vpop.f32.mrb[0].mxu0
  %v1688 = vadd.f32 %v1499, %v1687
  %v1689 = vpop.f32.mrb[0].mxu0
  %v1690 = vpop.f32.mrb[0].mxu0
  %v1691 = vadd.f32 %v1499, %v1690
  %v1692 = vpop.f32.mrb[0].mxu0
  %1693 = vmatprep.mubr.bf16.mxu0 0
  %1694 = vmatmul.mubr.bf16.gmra.mrb[0].mxu0 %v1477
  %v1695 = vpop.f32.mrb[0].mxu0
  %v1696 = vadd.f32 %v1499, %v1695
  %v1697 = vpop.f32.mrb[0].mxu0
  %v1698 = vpop.f32.mrb[0].mxu0
  %v1699 = vadd.f32 %v1499, %v1698
  %v1700 = vpop.f32.mrb[0].mxu0
  %1701 = vmatprep.mubr.bf16.mxu0 0
  %1702 = vmatmul.mubr.bf16.gmra.mrb[0].mxu0 %v1478
  %v1703 = vpop.f32.mrb[0].mxu0
  %v1704 = vadd.f32 %v1499, %v1703
  %v1705 = vpop.f32.mrb[0].mxu0
  %v1706 = vpop.f32.mrb[0].mxu0
  %v1707 = vadd.f32 %v1499, %v1706
  %v1708 = vpop.f32.mrb[0].mxu0
  %1709 = vdwg.mxu0
  %v1710 = vmax.f32 %v1584, 0.0
  %v1711 = vmax.f32 %v1587, 0.0
  %v1712 = vmax.f32 %v1592, 0.0
  %v1713 = vmax.f32 %v1595, 0.0
  %v1714 = vmax.f32 %v1600, 0.0
  %v1715 = vmax.f32 %v1603, 0.0
  %v1716 = vmax.f32 %v1608, 0.0
  %v1717 = vmax.f32 %v1611, 0.0
  %v1718 = vmax.f32 %v1616, 0.0
  %v1719 = vmax.f32 %v1619, 0.0
  %v1720 = vmax.f32 %v1624, 0.0
  %v1721 = vmax.f32 %v1627, 0.0
  %v1722 = vmax.f32 %v1632, 0.0
  %v1723 = vmax.f32 %v1635, 0.0
  %v1724 = vmax.f32 %v1640, 0.0
  %v1725 = vmax.f32 %v1643, 0.0
  %v1726 = vmax.f32 %v1648, 0.0
  %v1727 = vmax.f32 %v1651, 0.0
  %v1728 = vmax.f32 %v1656, 0.0
  %v1729 = vmax.f32 %v1659, 0.0
  %v1730 = vmax.f32 %v1664, 0.0
  %v1731 = vmax.f32 %v1667, 0.0
  %v1732 = vmax.f32 %v1672, 0.0
  %v1733 = vmax.f32 %v1675, 0.0
  %v1734 = vmax.f32 %v1680, 0.0
  %v1735 = vmax.f32 %v1683, 0.0
  %v1736 = vmax.f32 %v1688, 0.0
  %v1737 = vmax.f32 %v1691, 0.0
  %v1738 = vmax.f32 %v1696, 0.0
  %v1739 = vmax.f32 %v1699, 0.0
  %v1740 = vmax.f32 %v1704, 0.0
  %v1741 = vmax.f32 %v1707, 0.0
  %v1742 = vld [vmem:[%s10] sm:$0x1]
  %v1743 = vpack.c.bf16 %v1711, %v1710
  %v1744 = vpack.c.bf16 %v1713, %v1712
  %v1745 = vpack.c.bf16 %v1715, %v1714
  %v1746 = vpack.c.bf16 %v1717, %v1716
  %v1747 = vpack.c.bf16 %v1719, %v1718
  %v1748 = vpack.c.bf16 %v1721, %v1720
  %v1749 = vpack.c.bf16 %v1723, %v1722
  %v1750 = vpack.c.bf16 %v1725, %v1724
  %v1751 = vpack.c.bf16 %v1727, %v1726
  %v1752 = vpack.c.bf16 %v1729, %v1728
  %v1753 = vpack.c.bf16 %v1731, %v1730
  %v1754 = vpack.c.bf16 %v1733, %v1732
  %v1755 = vpack.c.bf16 %v1735, %v1734
  %v1756 = vpack.c.bf16 %v1737, %v1736
  %v1757 = vpack.c.bf16 %v1739, %v1738
  %v1758 = vpack.c.bf16 %v1741, %v1740
  %v1759 = vld [vmem:[%s9] sm:$0xf]
  %v1760 = vld [vmem:[%s9 + $0x4] sm:$0xf]
  %v1761 = vld [vmem:[%s9 + $0x8] sm:$0xf]
  %v1762 = vld [vmem:[%s9 + $0xc] sm:$0xf]
  %v1763 = vld [vmem:[%s9 + $0x10] sm:$0xf]
  %v1764 = vld [vmem:[%s9 + $0x14] sm:$0xf]
  %v1765 = vld [vmem:[%s9 + $0x18] sm:$0xf]
  %v1766 = vld [vmem:[%s9 + $0x1c] sm:$0xf]
  %v1768 = vlaneseq
  %v1769 = vshrl.u32 %v1768, 7
  %v1770 = vsub.s32 0, %v1769
  %v1771 = vrot.slane %v1742, %v1770
  %v1781 = vunpack.c.l.b16 %v1759
  %v1782 = vunpack.c.l.b16 %v1760
  %v1783 = vunpack.c.l.b16 %v1761
  %v1784 = vunpack.c.l.b16 %v1762
  %v1785 = vunpack.c.l.b16 %v1763
  %v1786 = vunpack.c.l.b16 %v1764
  %v1787 = vunpack.c.l.b16 %v1765
  %v1788 = vunpack.c.l.b16 %v1766
  %v1789 = vpack.c.b16 %v1782, %v1781
  %v1790 = vpack.c.b16 %v1784, %v1783
  %v1791 = vpack.c.b16 %v1786, %v1785
  %v1792 = vpack.c.b16 %v1788, %v1787
  %vm1797 = vcmask 523264
  %v1799 = vsel %vm1797, %v1743, 0
  %v1802 = vsel %vm1797, %v1744, 0
  %v1805 = vsel %vm1797, %v1745, 0
  %v1808 = vsel %vm1797, %v1746, 0
  %v1811 = vsel %vm1797, %v1747, 0
  %v1814 = vsel %vm1797, %v1748, 0
  %v1817 = vsel %vm1797, %v1749, 0
  %v1820 = vsel %vm1797, %v1750, 0
  %v1823 = vsel %vm1797, %v1751, 0
  %v1826 = vsel %vm1797, %v1752, 0
  %v1829 = vsel %vm1797, %v1753, 0
  %v1832 = vsel %vm1797, %v1754, 0
  %v1835 = vsel %vm1797, %v1755, 0
  %v1838 = vsel %vm1797, %v1756, 0
  %v1841 = vsel %vm1797, %v1757, 0
  %v1844 = vsel %vm1797, %v1758, 0
  %1846 = vmatprep.subr.bf16.mxu0 0
  %1847 = vmatpush1.bf16.msra.mxu0 %v1789
  %1848 = vmatprep.subr.bf16.mxu0 0
  %1849 = vmatpush1.bf16.msra.mxu0 %v1790
  %1850 = vmatprep.subr.bf16.mxu0 0
  %1851 = vmatpush1.bf16.msra.mxu0 %v1791
  %1852 = vmatprep.subr.bf16.mxu0 0
  %1853 = vmatpush1.bf16.msra.mxu0 %v1792
  %1854 = vmatprep.subr.bf16.mxu0 0
  %1855 = vmatpush1.bf16.msra.mxu0 0
  %1856 = vmatprep.subr.bf16.mxu0 0
  %1857 = vmatpush1.bf16.msra.mxu0 0
  %1858 = vmatprep.subr.bf16.mxu0 0
  %1859 = vmatpush1.bf16.msra.mxu0 0
  %1860 = vmatprep.subr.bf16.mxu0 0
  %1861 = vmatpush1.bf16.msra.mxu0 0
  %1862 = vmatprep.subr.bf16.mxu0 0
  %1863 = vmatpush1.bf16.msra.mxu0 0
  %1864 = vmatprep.subr.bf16.mxu0 0
  %1865 = vmatpush1.bf16.msra.mxu0 0
  %1866 = vmatprep.subr.bf16.mxu0 0
  %1867 = vmatpush1.bf16.msra.mxu0 0
  %1868 = vmatprep.subr.bf16.mxu0 0
  %1869 = vmatpush1.bf16.msra.mxu0 0
  %1870 = vmatprep.subr.bf16.mxu0 0
  %1871 = vmatpush1.bf16.msra.mxu0 0
  %1872 = vmatprep.subr.bf16.mxu0 0
  %1873 = vmatpush1.bf16.msra.mxu0 0
  %1874 = vmatprep.subr.bf16.mxu0 0
  %1875 = vmatpush1.bf16.msra.mxu0 0
  %1876 = vmatprep.subr.bf16.mxu0 0
  %1877 = vmatpush1.bf16.msra.mxu0 0
  %1878 = vmatprep.mubr.bf16.mxu0 0
  %1879 = vmatmul.mubr.bf16.gmra.mrb[0].mxu0 %v1799
  %v1880 = vpop.f32.mrb[0].mxu0
  %v1881 = vadd.f32 %v1771, %v1880
  %v1882 = vpop.f32.mrb[0].mxu0
  %v1883 = vpop.f32.mrb[0].mxu0
  %v1884 = vadd.f32 %v1771, %v1883
  %v1885 = vpop.f32.mrb[0].mxu0
  %1886 = vmatprep.mubr.bf16.mxu0 0
  %1887 = vmatmul.mubr.bf16.gmra.mrb[0].mxu0 %v1802
  %v1888 = vpop.f32.mrb[0].mxu0
  %v1889 = vadd.f32 %v1771, %v1888
  %v1890 = vpop.f32.mrb[0].mxu0
  %v1891 = vpop.f32.mrb[0].mxu0
  %v1892 = vadd.f32 %v1771, %v1891
  %v1893 = vpop.f32.mrb[0].mxu0
  %1894 = vmatprep.mubr.bf16.mxu0 0
  %1895 = vmatmul.mubr.bf16.gmra.mrb[0].mxu0 %v1805
  %v1896 = vpop.f32.mrb[0].mxu0
  %v1897 = vadd.f32 %v1771, %v1896
  %v1898 = vpop.f32.mrb[0].mxu0
  %v1899 = vpop.f32.mrb[0].mxu0
  %v1900 = vadd.f32 %v1771, %v1899
  %v1901 = vpop.f32.mrb[0].mxu0
  %1902 = vmatprep.mubr.bf16.mxu0 0
  %1903 = vmatmul.mubr.bf16.gmra.mrb[0].mxu0 %v1808
  %v1904 = vpop.f32.mrb[0].mxu0
  %v1905 = vadd.f32 %v1771, %v1904
  %v1906 = vpop.f32.mrb[0].mxu0
  %v1907 = vpop.f32.mrb[0].mxu0
  %v1908 = vadd.f32 %v1771, %v1907
  %v1909 = vpop.f32.mrb[0].mxu0
  %1910 = vmatprep.mubr.bf16.mxu0 0
  %1911 = vmatmul.mubr.bf16.gmra.mrb[0].mxu0 %v1811
  %v1912 = vpop.f32.mrb[0].mxu0
  %v1913 = vadd.f32 %v1771, %v1912
  %v1914 = vpop.f32.mrb[0].mxu0
  %v1915 = vpop.f32.mrb[0].mxu0
  %v1916 = vadd.f32 %v1771, %v1915
  %v1917 = vpop.f32.mrb[0].mxu0
  %1918 = vmatprep.mubr.bf16.mxu0 0
  %1919 = vmatmul.mubr.bf16.gmra.mrb[0].mxu0 %v1814
  %v1920 = vpop.f32.mrb[0].mxu0
  %v1921 = vadd.f32 %v1771, %v1920
  %v1922 = vpop.f32.mrb[0].mxu0
  %v1923 = vpop.f32.mrb[0].mxu0
  %v1924 = vadd.f32 %v1771, %v1923
  %v1925 = vpop.f32.mrb[0].mxu0
  %1926 = vmatprep.mubr.bf16.mxu0 0
  %1927 = vmatmul.mubr.bf16.gmra.mrb[0].mxu0 %v1817
  %v1928 = vpop.f32.mrb[0].mxu0
  %v1929 = vadd.f32 %v1771, %v1928
  %v1930 = vpop.f32.mrb[0].mxu0
  %v1931 = vpop.f32.mrb[0].mxu0
  %v1932 = vadd.f32 %v1771, %v1931
  %v1933 = vpop.f32.mrb[0].mxu0
  %1934 = vmatprep.mubr.bf16.mxu0 0
  %1935 = vmatmul.mubr.bf16.gmra.mrb[0].mxu0 %v1820
  %v1936 = vpop.f32.mrb[0].mxu0
  %v1937 = vadd.f32 %v1771, %v1936
  %v1938 = vpop.f32.mrb[0].mxu0
  %v1939 = vpop.f32.mrb[0].mxu0
  %v1940 = vadd.f32 %v1771, %v1939
  %v1941 = vpop.f32.mrb[0].mxu0
  %1942 = vmatprep.mubr.bf16.mxu0 0
  %1943 = vmatmul.mubr.bf16.gmra.mrb[0].mxu0 %v1823
  %v1944 = vpop.f32.mrb[0].mxu0
  %v1945 = vadd.f32 %v1771, %v1944
  %v1946 = vpop.f32.mrb[0].mxu0
  %v1947 = vpop.f32.mrb[0].mxu0
  %v1948 = vadd.f32 %v1771, %v1947
  %v1949 = vpop.f32.mrb[0].mxu0
  %1950 = vmatprep.mubr.bf16.mxu0 0
  %1951 = vmatmul.mubr.bf16.gmra.mrb[0].mxu0 %v1826
  %v1952 = vpop.f32.mrb[0].mxu0
  %v1953 = vadd.f32 %v1771, %v1952
  %v1954 = vpop.f32.mrb[0].mxu0
  %v1955 = vpop.f32.mrb[0].mxu0
  %v1956 = vadd.f32 %v1771, %v1955
  %v1957 = vpop.f32.mrb[0].mxu0
  %1958 = vmatprep.mubr.bf16.mxu0 0
  %1959 = vmatmul.mubr.bf16.gmra.mrb[0].mxu0 %v1829
  %v1960 = vpop.f32.mrb[0].mxu0
  %v1961 = vadd.f32 %v1771, %v1960
  %v1962 = vpop.f32.mrb[0].mxu0
  %v1963 = vpop.f32.mrb[0].mxu0
  %v1964 = vadd.f32 %v1771, %v1963
  %v1965 = vpop.f32.mrb[0].mxu0
  %1966 = vmatprep.mubr.bf16.mxu0 0
  %1967 = vmatmul.mubr.bf16.gmra.mrb[0].mxu0 %v1832
  %v1968 = vpop.f32.mrb[0].mxu0
  %v1969 = vadd.f32 %v1771, %v1968
  %v1970 = vpop.f32.mrb[0].mxu0
  %v1971 = vpop.f32.mrb[0].mxu0
  %v1972 = vadd.f32 %v1771, %v1971
  %v1973 = vpop.f32.mrb[0].mxu0
  %1974 = vmatprep.mubr.bf16.mxu0 0
  %1975 = vmatmul.mubr.bf16.gmra.mrb[0].mxu0 %v1835
  %v1976 = vpop.f32.mrb[0].mxu0
  %v1977 = vadd.f32 %v1771, %v1976
  %v1978 = vpop.f32.mrb[0].mxu0
  %v1979 = vpop.f32.mrb[0].mxu0
  %v1980 = vadd.f32 %v1771, %v1979
  %v1981 = vpop.f32.mrb[0].mxu0
  %1982 = vmatprep.mubr.bf16.mxu0 0
  %1983 = vmatmul.mubr.bf16.gmra.mrb[0].mxu0 %v1838
  %v1984 = vpop.f32.mrb[0].mxu0
  %v1985 = vadd.f32 %v1771, %v1984
  %v1986 = vpop.f32.mrb[0].mxu0
  %v1987 = vpop.f32.mrb[0].mxu0
  %v1988 = vadd.f32 %v1771, %v1987
  %v1989 = vpop.f32.mrb[0].mxu0
  %1990 = vmatprep.mubr.bf16.mxu0 0
  %1991 = vmatmul.mubr.bf16.gmra.mrb[0].mxu0 %v1841
  %v1992 = vpop.f32.mrb[0].mxu0
  %v1993 = vadd.f32 %v1771, %v1992
  %v1994 = vpop.f32.mrb[0].mxu0
  %v1995 = vpop.f32.mrb[0].mxu0
  %v1996 = vadd.f32 %v1771, %v1995
  %v1997 = vpop.f32.mrb[0].mxu0
  %1998 = vmatprep.mubr.bf16.mxu0 0
  %1999 = vmatmul.mubr.bf16.gmra.mrb[0].mxu0 %v1844
  %v2000 = vpop.f32.mrb[0].mxu0
  %v2001 = vadd.f32 %v1771, %v2000
  %v2002 = vpop.f32.mrb[0].mxu0
  %v2003 = vpop.f32.mrb[0].mxu0
  %v2004 = vadd.f32 %v1771, %v2003
  %v2005 = vpop.f32.mrb[0].mxu0
  %2006 = vdwg.mxu0
  %v2007 = vmax.f32 %v1881, 0.0
  %v2008 = vmax.f32 %v1884, 0.0
  %v2009 = vmax.f32 %v1889, 0.0
  %v2010 = vmax.f32 %v1892, 0.0
  %v2011 = vmax.f32 %v1897, 0.0
  %v2012 = vmax.f32 %v1900, 0.0
  %v2013 = vmax.f32 %v1905, 0.0
  %v2014 = vmax.f32 %v1908, 0.0
  %v2015 = vmax.f32 %v1913, 0.0
  %v2016 = vmax.f32 %v1916, 0.0
  %v2017 = vmax.f32 %v1921, 0.0
  %v2018 = vmax.f32 %v1924, 0.0
  %v2019 = vmax.f32 %v1929, 0.0
  %v2020 = vmax.f32 %v1932, 0.0
  %v2021 = vmax.f32 %v1937, 0.0
  %v2022 = vmax.f32 %v1940, 0.0
  %v2023 = vmax.f32 %v1945, 0.0
  %v2024 = vmax.f32 %v1948, 0.0
  %v2025 = vmax.f32 %v1953, 0.0
  %v2026 = vmax.f32 %v1956, 0.0
  %v2027 = vmax.f32 %v1961, 0.0
  %v2028 = vmax.f32 %v1964, 0.0
  %v2029 = vmax.f32 %v1969, 0.0
  %v2030 = vmax.f32 %v1972, 0.0
  %v2031 = vmax.f32 %v1977, 0.0
  %v2032 = vmax.f32 %v1980, 0.0
  %v2033 = vmax.f32 %v1985, 0.0
  %v2034 = vmax.f32 %v1988, 0.0
  %v2035 = vmax.f32 %v1993, 0.0
  %v2036 = vmax.f32 %v1996, 0.0
  %v2037 = vmax.f32 %v2001, 0.0
  %v2038 = vmax.f32 %v2004, 0.0
  %v2039 = vld [vmem:[%s12] sm:$0x1]
  %v2040 = vpack.c.bf16 %v2008, %v2007
  %v2041 = vpack.c.bf16 %v2010, %v2009
  %v2042 = vpack.c.bf16 %v2012, %v2011
  %v2043 = vpack.c.bf16 %v2014, %v2013
  %v2044 = vpack.c.bf16 %v2016, %v2015
  %v2045 = vpack.c.bf16 %v2018, %v2017
  %v2046 = vpack.c.bf16 %v2020, %v2019
  %v2047 = vpack.c.bf16 %v2022, %v2021
  %v2048 = vpack.c.bf16 %v2024, %v2023
  %v2049 = vpack.c.bf16 %v2026, %v2025
  %v2050 = vpack.c.bf16 %v2028, %v2027
  %v2051 = vpack.c.bf16 %v2030, %v2029
  %v2052 = vpack.c.bf16 %v2032, %v2031
  %v2053 = vpack.c.bf16 %v2034, %v2033
  %v2054 = vpack.c.bf16 %v2036, %v2035
  %v2055 = vpack.c.bf16 %v2038, %v2037
  %v2056 = vld [vmem:[%s11] sm:$0xf]
  %v2057 = vld [vmem:[%s11 + $0x4] sm:$0xf]
  %v2058 = vld [vmem:[%s11 + $0x8] sm:$0xf]
  %v2059 = vld [vmem:[%s11 + $0xc] sm:$0xf]
  %v2061 = vlaneseq
  %v2062 = vshrl.u32 %v2061, 7
  %v2063 = vsub.s32 0, %v2062
  %v2064 = vrot.slane %v2039, %v2063
  %v2070 = vunpack.c.l.b16 %v2056
  %v2071 = vunpack.c.l.b16 %v2057
  %v2072 = vunpack.c.l.b16 %v2058
  %v2073 = vunpack.c.l.b16 %v2059
  %v2074 = vpack.c.b16 %v2071, %v2070
  %v2075 = vpack.c.b16 %v2073, %v2072
  %vm2078 = vcmask 261120
  %v2080 = vsel %vm2078, %v2040, 0
  %v2083 = vsel %vm2078, %v2041, 0
  %v2086 = vsel %vm2078, %v2042, 0
  %v2089 = vsel %vm2078, %v2043, 0
  %v2092 = vsel %vm2078, %v2044, 0
  %v2095 = vsel %vm2078, %v2045, 0
  %v2098 = vsel %vm2078, %v2046, 0
  %v2101 = vsel %vm2078, %v2047, 0
  %v2104 = vsel %vm2078, %v2048, 0
  %v2107 = vsel %vm2078, %v2049, 0
  %v2110 = vsel %vm2078, %v2050, 0
  %v2113 = vsel %vm2078, %v2051, 0
  %v2116 = vsel %vm2078, %v2052, 0
  %v2119 = vsel %vm2078, %v2053, 0
  %v2122 = vsel %vm2078, %v2054, 0
  %v2125 = vsel %vm2078, %v2055, 0
  %2127 = vmatprep.subr.bf16.mxu0 0
  %2128 = vmatpush1.bf16.msra.mxu0 %v2074
  %2129 = vmatprep.subr.bf16.mxu0 0
  %2130 = vmatpush1.bf16.msra.mxu0 %v2075
  %2131 = vmatprep.subr.bf16.mxu0 0
  %2132 = vmatpush1.bf16.msra.mxu0 0
  %2133 = vmatprep.subr.bf16.mxu0 0
  %2134 = vmatpush1.bf16.msra.mxu0 0
  %2135 = vmatprep.subr.bf16.mxu0 0
  %2136 = vmatpush1.bf16.msra.mxu0 0
  %2137 = vmatprep.subr.bf16.mxu0 0
  %2138 = vmatpush1.bf16.msra.mxu0 0
  %2139 = vmatprep.subr.bf16.mxu0 0
  %2140 = vmatpush1.bf16.msra.mxu0 0
  %2141 = vmatprep.subr.bf16.mxu0 0
  %2142 = vmatpush1.bf16.msra.mxu0 0
  %2143 = vmatprep.subr.bf16.mxu0 0
  %2144 = vmatpush1.bf16.msra.mxu0 0
  %2145 = vmatprep.subr.bf16.mxu0 0
  %2146 = vmatpush1.bf16.msra.mxu0 0
  %2147 = vmatprep.subr.bf16.mxu0 0
  %2148 = vmatpush1.bf16.msra.mxu0 0
  %2149 = vmatprep.subr.bf16.mxu0 0
  %2150 = vmatpush1.bf16.msra.mxu0 0
  %2151 = vmatprep.subr.bf16.mxu0 0
  %2152 = vmatpush1.bf16.msra.mxu0 0
  %2153 = vmatprep.subr.bf16.mxu0 0
  %2154 = vmatpush1.bf16.msra.mxu0 0
  %2155 = vmatprep.subr.bf16.mxu0 0
  %2156 = vmatpush1.bf16.msra.mxu0 0
  %2157 = vmatprep.subr.bf16.mxu0 0
  %2158 = vmatpush1.bf16.msra.mxu0 0
  %2159 = vmatprep.mubr.bf16.mxu0 0
  %2160 = vmatmul.mubr.bf16.gmra.mrb[0].mxu0 %v2080
  %v2161 = vpop.f32.mrb[0].mxu0
  %v2162 = vadd.f32 %v2064, %v2161
  %v2163 = vpop.f32.mrb[0].mxu0
  %v2164 = vpop.f32.mrb[0].mxu0
  %v2165 = vadd.f32 %v2064, %v2164
  %v2166 = vpop.f32.mrb[0].mxu0
  %2167 = vmatprep.mubr.bf16.mxu0 0
  %2168 = vmatmul.mubr.bf16.gmra.mrb[0].mxu0 %v2083
  %v2169 = vpop.f32.mrb[0].mxu0
  %v2170 = vadd.f32 %v2064, %v2169
  %v2171 = vpop.f32.mrb[0].mxu0
  %v2172 = vpop.f32.mrb[0].mxu0
  %v2173 = vadd.f32 %v2064, %v2172
  %v2174 = vpop.f32.mrb[0].mxu0
  %2175 = vmatprep.mubr.bf16.mxu0 0
  %2176 = vmatmul.mubr.bf16.gmra.mrb[0].mxu0 %v2086
  %v2177 = vpop.f32.mrb[0].mxu0
  %v2178 = vadd.f32 %v2064, %v2177
  %v2179 = vpop.f32.mrb[0].mxu0
  %v2180 = vpop.f32.mrb[0].mxu0
  %v2181 = vadd.f32 %v2064, %v2180
  %v2182 = vpop.f32.mrb[0].mxu0
  %2183 = vmatprep.mubr.bf16.mxu0 0
  %2184 = vmatmul.mubr.bf16.gmra.mrb[0].mxu0 %v2089
  %v2185 = vpop.f32.mrb[0].mxu0
  %v2186 = vadd.f32 %v2064, %v2185
  %v2187 = vpop.f32.mrb[0].mxu0
  %v2188 = vpop.f32.mrb[0].mxu0
  %v2189 = vadd.f32 %v2064, %v2188
  %v2190 = vpop.f32.mrb[0].mxu0
  %2191 = vmatprep.mubr.bf16.mxu0 0
  %2192 = vmatmul.mubr.bf16.gmra.mrb[0].mxu0 %v2092
  %v2193 = vpop.f32.mrb[0].mxu0
  %v2194 = vadd.f32 %v2064, %v2193
  %v2195 = vpop.f32.mrb[0].mxu0
  %v2196 = vpop.f32.mrb[0].mxu0
  %v2197 = vadd.f32 %v2064, %v2196
  %v2198 = vpop.f32.mrb[0].mxu0
  %2199 = vmatprep.mubr.bf16.mxu0 0
  %2200 = vmatmul.mubr.bf16.gmra.mrb[0].mxu0 %v2095
  %v2201 = vpop.f32.mrb[0].mxu0
  %v2202 = vadd.f32 %v2064, %v2201
  %v2203 = vpop.f32.mrb[0].mxu0
  %v2204 = vpop.f32.mrb[0].mxu0
  %v2205 = vadd.f32 %v2064, %v2204
  %v2206 = vpop.f32.mrb[0].mxu0
  %2207 = vmatprep.mubr.bf16.mxu0 0
  %2208 = vmatmul.mubr.bf16.gmra.mrb[0].mxu0 %v2098
  %v2209 = vpop.f32.mrb[0].mxu0
  %v2210 = vadd.f32 %v2064, %v2209
  %v2211 = vpop.f32.mrb[0].mxu0
  %v2212 = vpop.f32.mrb[0].mxu0
  %v2213 = vadd.f32 %v2064, %v2212
  %v2214 = vpop.f32.mrb[0].mxu0
  %2215 = vmatprep.mubr.bf16.mxu0 0
  %2216 = vmatmul.mubr.bf16.gmra.mrb[0].mxu0 %v2101
  %v2217 = vpop.f32.mrb[0].mxu0
  %v2218 = vadd.f32 %v2064, %v2217
  %v2219 = vpop.f32.mrb[0].mxu0
  %v2220 = vpop.f32.mrb[0].mxu0
  %v2221 = vadd.f32 %v2064, %v2220
  %v2222 = vpop.f32.mrb[0].mxu0
  %2223 = vmatprep.mubr.bf16.mxu0 0
  %2224 = vmatmul.mubr.bf16.gmra.mrb[0].mxu0 %v2104
  %v2225 = vpop.f32.mrb[0].mxu0
  %v2226 = vadd.f32 %v2064, %v2225
  %v2227 = vpop.f32.mrb[0].mxu0
  %v2228 = vpop.f32.mrb[0].mxu0
  %v2229 = vadd.f32 %v2064, %v2228
  %v2230 = vpop.f32.mrb[0].mxu0
  %2231 = vmatprep.mubr.bf16.mxu0 0
  %2232 = vmatmul.mubr.bf16.gmra.mrb[0].mxu0 %v2107
  %v2233 = vpop.f32.mrb[0].mxu0
  %v2234 = vadd.f32 %v2064, %v2233
  %v2235 = vpop.f32.mrb[0].mxu0
  %v2236 = vpop.f32.mrb[0].mxu0
  %v2237 = vadd.f32 %v2064, %v2236
  %v2238 = vpop.f32.mrb[0].mxu0
  %2239 = vmatprep.mubr.bf16.mxu0 0
  %2240 = vmatmul.mubr.bf16.gmra.mrb[0].mxu0 %v2110
  %v2241 = vpop.f32.mrb[0].mxu0
  %v2242 = vadd.f32 %v2064, %v2241
  %v2243 = vpop.f32.mrb[0].mxu0
  %v2244 = vpop.f32.mrb[0].mxu0
  %v2245 = vadd.f32 %v2064, %v2244
  %v2246 = vpop.f32.mrb[0].mxu0
  %2247 = vmatprep.mubr.bf16.mxu0 0
  %2248 = vmatmul.mubr.bf16.gmra.mrb[0].mxu0 %v2113
  %v2249 = vpop.f32.mrb[0].mxu0
  %v2250 = vadd.f32 %v2064, %v2249
  %v2251 = vpop.f32.mrb[0].mxu0
  %v2252 = vpop.f32.mrb[0].mxu0
  %v2253 = vadd.f32 %v2064, %v2252
  %v2254 = vpop.f32.mrb[0].mxu0
  %2255 = vmatprep.mubr.bf16.mxu0 0
  %2256 = vmatmul.mubr.bf16.gmra.mrb[0].mxu0 %v2116
  %v2257 = vpop.f32.mrb[0].mxu0
  %v2258 = vadd.f32 %v2064, %v2257
  %v2259 = vpop.f32.mrb[0].mxu0
  %v2260 = vpop.f32.mrb[0].mxu0
  %v2261 = vadd.f32 %v2064, %v2260
  %v2262 = vpop.f32.mrb[0].mxu0
  %2263 = vmatprep.mubr.bf16.mxu0 0
  %2264 = vmatmul.mubr.bf16.gmra.mrb[0].mxu0 %v2119
  %v2265 = vpop.f32.mrb[0].mxu0
  %v2266 = vadd.f32 %v2064, %v2265
  %v2267 = vpop.f32.mrb[0].mxu0
  %v2268 = vpop.f32.mrb[0].mxu0
  %v2269 = vadd.f32 %v2064, %v2268
  %v2270 = vpop.f32.mrb[0].mxu0
  %2271 = vmatprep.mubr.bf16.mxu0 0
  %2272 = vmatmul.mubr.bf16.gmra.mrb[0].mxu0 %v2122
  %v2273 = vpop.f32.mrb[0].mxu0
  %v2274 = vadd.f32 %v2064, %v2273
  %v2275 = vpop.f32.mrb[0].mxu0
  %v2276 = vpop.f32.mrb[0].mxu0
  %v2277 = vadd.f32 %v2064, %v2276
  %v2278 = vpop.f32.mrb[0].mxu0
  %2279 = vmatprep.mubr.bf16.mxu0 0
  %2280 = vmatmul.mubr.bf16.gmra.mrb[0].mxu0 %v2125
  %v2281 = vpop.f32.mrb[0].mxu0
  %v2282 = vadd.f32 %v2064, %v2281
  %v2283 = vpop.f32.mrb[0].mxu0
  %v2284 = vpop.f32.mrb[0].mxu0
  %v2285 = vadd.f32 %v2064, %v2284
  %v2286 = vpop.f32.mrb[0].mxu0
  %2287 = vdwg.mxu0
  %v2288 = vmax.f32 %v2162, 0.0
  %v2289 = vmax.f32 %v2165, 0.0
  %v2290 = vmax.f32 %v2170, 0.0
  %v2291 = vmax.f32 %v2173, 0.0
  %v2292 = vmax.f32 %v2178, 0.0
  %v2293 = vmax.f32 %v2181, 0.0
  %v2294 = vmax.f32 %v2186, 0.0
  %v2295 = vmax.f32 %v2189, 0.0
  %v2296 = vmax.f32 %v2194, 0.0
  %v2297 = vmax.f32 %v2197, 0.0
  %v2298 = vmax.f32 %v2202, 0.0
  %v2299 = vmax.f32 %v2205, 0.0
  %v2300 = vmax.f32 %v2210, 0.0
  %v2301 = vmax.f32 %v2213, 0.0
  %v2302 = vmax.f32 %v2218, 0.0
  %v2303 = vmax.f32 %v2221, 0.0
  %v2304 = vmax.f32 %v2226, 0.0
  %v2305 = vmax.f32 %v2229, 0.0
  %v2306 = vmax.f32 %v2234, 0.0
  %v2307 = vmax.f32 %v2237, 0.0
  %v2308 = vmax.f32 %v2242, 0.0
  %v2309 = vmax.f32 %v2245, 0.0
  %v2310 = vmax.f32 %v2250, 0.0
  %v2311 = vmax.f32 %v2253, 0.0
  %v2312 = vmax.f32 %v2258, 0.0
  %v2313 = vmax.f32 %v2261, 0.0
  %v2314 = vmax.f32 %v2266, 0.0
  %v2315 = vmax.f32 %v2269, 0.0
  %v2316 = vmax.f32 %v2274, 0.0
  %v2317 = vmax.f32 %v2277, 0.0
  %v2318 = vmax.f32 %v2282, 0.0
  %v2319 = vmax.f32 %v2285, 0.0
  %v2320 = vld [vmem:[%s13] sm:$0x1]
  %v2322 = vlaneseq
  %v2323 = vshrl.u32 %v2322, 7
  %v2324 = vsub.s32 0, %v2323
  %v2325 = vrot.slane %v2320, %v2324
  %v2327 = vmul.f32 %v2288, %v2325
  %v2328 = vmul.f32 %v2289, %v2325
  %v2329 = vmul.f32 %v2290, %v2325
  %v2330 = vmul.f32 %v2291, %v2325
  %v2331 = vmul.f32 %v2292, %v2325
  %v2332 = vmul.f32 %v2293, %v2325
  %v2333 = vmul.f32 %v2294, %v2325
  %v2334 = vmul.f32 %v2295, %v2325
  %v2335 = vmul.f32 %v2296, %v2325
  %v2336 = vmul.f32 %v2297, %v2325
  %v2337 = vmul.f32 %v2298, %v2325
  %v2338 = vmul.f32 %v2299, %v2325
  %v2339 = vmul.f32 %v2300, %v2325
  %v2340 = vmul.f32 %v2301, %v2325
  %v2341 = vmul.f32 %v2302, %v2325
  %v2342 = vmul.f32 %v2303, %v2325
  %v2343 = vmul.f32 %v2304, %v2325
  %v2344 = vmul.f32 %v2305, %v2325
  %v2345 = vmul.f32 %v2306, %v2325
  %v2346 = vmul.f32 %v2307, %v2325
  %v2347 = vmul.f32 %v2308, %v2325
  %v2348 = vmul.f32 %v2309, %v2325
  %v2349 = vmul.f32 %v2310, %v2325
  %v2350 = vmul.f32 %v2311, %v2325
  %v2351 = vmul.f32 %v2312, %v2325
  %v2352 = vmul.f32 %v2313, %v2325
  %v2353 = vmul.f32 %v2314, %v2325
  %v2354 = vmul.f32 %v2315, %v2325
  %v2355 = vmul.f32 %v2316, %v2325
  %v2356 = vmul.f32 %v2317, %v2325
  %v2357 = vmul.f32 %v2318, %v2325
  %v2358 = vmul.f32 %v2319, %v2325
  %vm2359 = vcmask 31744
  %v2360 = vsel %vm2359, %v2327, 0.0
  %2361 = vadd.xlane.f32.xlu0 %v2360
  %v2362 = vpop.xlane.xlu0 %2361
  %v2363 = vsel %vm2359, %v2328, 0.0
  %2364 = vadd.xlane.f32.xlu0 %v2363
  %v2365 = vpop.xlane.xlu0 %2364
  %v2366 = vsel %vm2359, %v2329, 0.0
  %2367 = vadd.xlane.f32.xlu0 %v2366
  %v2368 = vpop.xlane.xlu0 %2367
  %v2369 = vsel %vm2359, %v2330, 0.0
  %2370 = vadd.xlane.f32.xlu0 %v2369
  %v2371 = vpop.xlane.xlu0 %2370
  %v2372 = vsel %vm2359, %v2331, 0.0
  %2373 = vadd.xlane.f32.xlu0 %v2372
  %v2374 = vpop.xlane.xlu0 %2373
  %v2375 = vsel %vm2359, %v2332, 0.0
  %2376 = vadd.xlane.f32.xlu0 %v2375
  %v2377 = vpop.xlane.xlu0 %2376
  %v2378 = vsel %vm2359, %v2333, 0.0
  %2379 = vadd.xlane.f32.xlu0 %v2378
  %v2380 = vpop.xlane.xlu0 %2379
  %v2381 = vsel %vm2359, %v2334, 0.0
  %2382 = vadd.xlane.f32.xlu0 %v2381
  %v2383 = vpop.xlane.xlu0 %2382
  %v2384 = vsel %vm2359, %v2335, 0.0
  %2385 = vadd.xlane.f32.xlu0 %v2384
  %v2386 = vpop.xlane.xlu0 %2385
  %v2387 = vsel %vm2359, %v2336, 0.0
  %2388 = vadd.xlane.f32.xlu0 %v2387
  %v2389 = vpop.xlane.xlu0 %2388
  %v2390 = vsel %vm2359, %v2337, 0.0
  %2391 = vadd.xlane.f32.xlu0 %v2390
  %v2392 = vpop.xlane.xlu0 %2391
  %v2393 = vsel %vm2359, %v2338, 0.0
  %2394 = vadd.xlane.f32.xlu0 %v2393
  %v2395 = vpop.xlane.xlu0 %2394
  %v2396 = vsel %vm2359, %v2339, 0.0
  %2397 = vadd.xlane.f32.xlu0 %v2396
  %v2398 = vpop.xlane.xlu0 %2397
  %v2399 = vsel %vm2359, %v2340, 0.0
  %2400 = vadd.xlane.f32.xlu0 %v2399
  %v2401 = vpop.xlane.xlu0 %2400
  %v2402 = vsel %vm2359, %v2341, 0.0
  %2403 = vadd.xlane.f32.xlu0 %v2402
  %v2404 = vpop.xlane.xlu0 %2403
  %v2405 = vsel %vm2359, %v2342, 0.0
  %2406 = vadd.xlane.f32.xlu0 %v2405
  %v2407 = vpop.xlane.xlu0 %2406
  %v2408 = vsel %vm2359, %v2343, 0.0
  %2409 = vadd.xlane.f32.xlu0 %v2408
  %v2410 = vpop.xlane.xlu0 %2409
  %v2411 = vsel %vm2359, %v2344, 0.0
  %2412 = vadd.xlane.f32.xlu0 %v2411
  %v2413 = vpop.xlane.xlu0 %2412
  %v2414 = vsel %vm2359, %v2345, 0.0
  %2415 = vadd.xlane.f32.xlu0 %v2414
  %v2416 = vpop.xlane.xlu0 %2415
  %v2417 = vsel %vm2359, %v2346, 0.0
  %2418 = vadd.xlane.f32.xlu0 %v2417
  %v2419 = vpop.xlane.xlu0 %2418
  %v2420 = vsel %vm2359, %v2347, 0.0
  %2421 = vadd.xlane.f32.xlu0 %v2420
  %v2422 = vpop.xlane.xlu0 %2421
  %v2423 = vsel %vm2359, %v2348, 0.0
  %2424 = vadd.xlane.f32.xlu0 %v2423
  %v2425 = vpop.xlane.xlu0 %2424
  %v2426 = vsel %vm2359, %v2349, 0.0
  %2427 = vadd.xlane.f32.xlu0 %v2426
  %v2428 = vpop.xlane.xlu0 %2427
  %v2429 = vsel %vm2359, %v2350, 0.0
  %2430 = vadd.xlane.f32.xlu0 %v2429
  %v2431 = vpop.xlane.xlu0 %2430
  %v2432 = vsel %vm2359, %v2351, 0.0
  %2433 = vadd.xlane.f32.xlu0 %v2432
  %v2434 = vpop.xlane.xlu0 %2433
  %v2435 = vsel %vm2359, %v2352, 0.0
  %2436 = vadd.xlane.f32.xlu0 %v2435
  %v2437 = vpop.xlane.xlu0 %2436
  %v2438 = vsel %vm2359, %v2353, 0.0
  %2439 = vadd.xlane.f32.xlu0 %v2438
  %v2440 = vpop.xlane.xlu0 %2439
  %v2441 = vsel %vm2359, %v2354, 0.0
  %2442 = vadd.xlane.f32.xlu0 %v2441
  %v2443 = vpop.xlane.xlu0 %2442
  %v2444 = vsel %vm2359, %v2355, 0.0
  %2445 = vadd.xlane.f32.xlu0 %v2444
  %v2446 = vpop.xlane.xlu0 %2445
  %v2447 = vsel %vm2359, %v2356, 0.0
  %2448 = vadd.xlane.f32.xlu0 %v2447
  %v2449 = vpop.xlane.xlu0 %2448
  %v2450 = vsel %vm2359, %v2357, 0.0
  %2451 = vadd.xlane.f32.xlu0 %v2450
  %v2452 = vpop.xlane.xlu0 %2451
  %v2453 = vsel %vm2359, %v2358, 0.0
  %2454 = vadd.xlane.f32.xlu0 %v2453
  %v2455 = vpop.xlane.xlu0 %2454
  %v2456 = vld [vmem:[#allocation2] sm:$0x1]
  %v2458 = vlaneseq
  %v2459 = vshrl.u32 %v2458, 7
  %v2460 = vsub.s32 0, %v2459
  %v2461 = vrot.slane %v2456, %v2460
  %v2463 = vadd.f32 %v2362, %v2461
  %v2464 = vadd.f32 %v2365, %v2461
  %v2465 = vadd.f32 %v2368, %v2461
  %v2466 = vadd.f32 %v2371, %v2461
  %v2467 = vadd.f32 %v2374, %v2461
  %v2468 = vadd.f32 %v2377, %v2461
  %v2469 = vadd.f32 %v2380, %v2461
  %v2470 = vadd.f32 %v2383, %v2461
  %v2471 = vadd.f32 %v2386, %v2461
  %v2472 = vadd.f32 %v2389, %v2461
  %v2473 = vadd.f32 %v2392, %v2461
  %v2474 = vadd.f32 %v2395, %v2461
  %v2475 = vadd.f32 %v2398, %v2461
  %v2476 = vadd.f32 %v2401, %v2461
  %v2477 = vadd.f32 %v2404, %v2461
  %v2478 = vadd.f32 %v2407, %v2461
  %v2479 = vadd.f32 %v2410, %v2461
  %v2480 = vadd.f32 %v2413, %v2461
  %v2481 = vadd.f32 %v2416, %v2461
  %v2482 = vadd.f32 %v2419, %v2461
  %v2483 = vadd.f32 %v2422, %v2461
  %v2484 = vadd.f32 %v2425, %v2461
  %v2485 = vadd.f32 %v2428, %v2461
  %v2486 = vadd.f32 %v2431, %v2461
  %v2487 = vadd.f32 %v2434, %v2461
  %v2488 = vadd.f32 %v2437, %v2461
  %v2489 = vadd.f32 %v2440, %v2461
  %v2490 = vadd.f32 %v2443, %v2461
  %v2491 = vadd.f32 %v2446, %v2461
  %v2492 = vadd.f32 %v2449, %v2461
  %v2493 = vadd.f32 %v2452, %v2461
  %v2494 = vadd.f32 %v2455, %v2461
  %vm2495 = vcmask 7168
  %2496 = vst.msk [vmem:[%s15] sm:$0xff] %vm2495, %v2463
  %2497 = vst.msk [vmem:[%s15 + $0x8] sm:$0xff] %vm2495, %v2464
  %2498 = vst.msk [vmem:[%s15 + $0x10] sm:$0xff] %vm2495, %v2465
  %2499 = vst.msk [vmem:[%s15 + $0x18] sm:$0xff] %vm2495, %v2466
  %2500 = vst.msk [vmem:[%s15 + $0x20] sm:$0xff] %vm2495, %v2467
  %2501 = vst.msk [vmem:[%s15 + $0x28] sm:$0xff] %vm2495, %v2468
  %2502 = vst.msk [vmem:[%s15 + $0x30] sm:$0xff] %vm2495, %v2469
  %2503 = vst.msk [vmem:[%s15 + $0x38] sm:$0xff] %vm2495, %v2470
  %2504 = vst.msk [vmem:[%s15 + $0x40] sm:$0xff] %vm2495, %v2471
  %2505 = vst.msk [vmem:[%s15 + $0x48] sm:$0xff] %vm2495, %v2472
  %2506 = vst.msk [vmem:[%s15 + $0x50] sm:$0xff] %vm2495, %v2473
  %2507 = vst.msk [vmem:[%s15 + $0x58] sm:$0xff] %vm2495, %v2474
  %2508 = vst.msk [vmem:[%s15 + $0x60] sm:$0xff] %vm2495, %v2475
  %2509 = vst.msk [vmem:[%s15 + $0x68] sm:$0xff] %vm2495, %v2476
  %2510 = vst.msk [vmem:[%s15 + $0x70] sm:$0xff] %vm2495, %v2477
  %2511 = vst.msk [vmem:[%s15 + $0x78] sm:$0xff] %vm2495, %v2478
  %2512 = vst.msk [vmem:[%s15 + $0x80] sm:$0xff] %vm2495, %v2479
  %2513 = vst.msk [vmem:[%s15 + $0x88] sm:$0xff] %vm2495, %v2480
  %2514 = vst.msk [vmem:[%s15 + $0x90] sm:$0xff] %vm2495, %v2481
  %2515 = vst.msk [vmem:[%s15 + $0x98] sm:$0xff] %vm2495, %v2482
  %2516 = vst.msk [vmem:[%s15 + $0xa0] sm:$0xff] %vm2495, %v2483
  %2517 = vst.msk [vmem:[%s15 + $0xa8] sm:$0xff] %vm2495, %v2484
  %2518 = vst.msk [vmem:[%s15 + $0xb0] sm:$0xff] %vm2495, %v2485
  %2519 = vst.msk [vmem:[%s15 + $0xb8] sm:$0xff] %vm2495, %v2486
  %2520 = vst.msk [vmem:[%s15 + $0xc0] sm:$0xff] %vm2495, %v2487
  %2521 = vst.msk [vmem:[%s15 + $0xc8] sm:$0xff] %vm2495, %v2488
  %2522 = vst.msk [vmem:[%s15 + $0xd0] sm:$0xff] %vm2495, %v2489
  %2523 = vst.msk [vmem:[%s15 + $0xd8] sm:$0xff] %vm2495, %v2490
  %2524 = vst.msk [vmem:[%s15 + $0xe0] sm:$0xff] %vm2495, %v2491
  %2525 = vst.msk [vmem:[%s15 + $0xe8] sm:$0xff] %vm2495, %v2492
  %2526 = vst.msk [vmem:[%s15 + $0xf0] sm:$0xff] %vm2495, %v2493
  %2527 = vst.msk [vmem:[%s15 + $0xf8] sm:$0xff] %vm2495, %v2494
  // Predicated region
  $region62: #{net_forward.1} parent=0 // pred_check
    _
  $region63: #{net_forward.1} parent=0 // pred_check_branch
    %2529 = sbr.rel (0) target = $region65
  $region64: #{net_forward.1} parent=0 // pred_region
    _
  $region65: #{net_forward.1} parent=0 // pred_fallthru
    _
  // Predicated region
  $region66: #{net_forward.1} parent=0 // pred_check
    _
  $region67: #{net_forward.1} parent=0 // pred_check_branch
    %2531 = sbr.rel (0) target = $region69
  $region68: #{net_forward.1} parent=0 // pred_region
    _
  $region69: #{net_forward.1} parent=0 // pred_fallthru
    _

</llo_original>
